<compile_context>
chip_gen: v5e
topology: v5e:2x2
jax: 0.10.0
libtpu: 0.0.40
codegen_flags: <defaults>
</compile_context>

<pallas_src>
import jax
import jax.numpy as jnp
from jax.experimental import pallas as pl
from jax.experimental.pallas import tpu as pltpu


# ----------------------------- Pallas kernel ------------------------------- #
def _bigru_head_kernel(gi_ref,               # (T*B, 6H) f32: per-token pre-projected
                       #   gates, time-major rows, layout [f_r|f_z|f_n|b_r|b_z|b_n]
                       lens_ref,              # (B, 1) int32 total lengths
                       h0_ref,                # (2, B, H) f32 initial hidden
                       whh_f_ref, whh_b_ref,  # (H, 3H) hidden-to-hidden (r|z|n)
                       bfn_ref, bbn_ref,      # (1, H) b_hh_n per direction
                       w1f_ref, w1b_ref,      # (H, 100) each  (split of w1)
                       b1_ref,                # (1, 100)
                       w2_ref, b2_ref,        # (100, C), (1, C)
                       hs_ref,                # out: (B, 2H) hidden_sents
                       logits_ref):           # out: (B, C)
    TB = gi_ref.shape[0]
    B = h0_ref.shape[1]
    H = h0_ref.shape[2]
    T = TB // B

    gi = gi_ref[...]                          # (T*B, 6H)
    # Per-direction/per-gate lane slices taken ONCE, outside the recurrence.
    gi_fr = gi[:, 0 * H:1 * H]
    gi_fz = gi[:, 1 * H:2 * H]
    gi_fn = gi[:, 2 * H:3 * H]
    gi_br = gi[:, 3 * H:4 * H]
    gi_bz = gi[:, 4 * H:5 * H]
    gi_bn = gi[:, 5 * H:6 * H]

    whh_f = whh_f_ref[...]
    whh_b = whh_b_ref[...]
    bfn = bfn_ref[...]
    bbn = bbn_ref[...]

    # Length masks hoisted out of the loop: mask[t] = (t < len), shape (T,B,1).
    lens = lens_ref[...]                              # (B, 1) int32
    t_idx = jax.lax.broadcasted_iota(jnp.int32, (T, B, 1), 0)
    mask = t_idx < lens[None, :, :]                   # (T, B, 1) bool

    def cell(g_r, g_z, g_n, h, whh, b_n):
        # One fused (B,H)@(H,3H) matmul per direction per step on the serial
        # chain; gate extraction from the 3H-wide result is XLU filler.
        gh = jnp.dot(h, whh, preferred_element_type=jnp.float32)     # (B, 3H)
        r = jax.nn.sigmoid(g_r + gh[:, 0 * H:1 * H])
        z = jax.nn.sigmoid(g_z + gh[:, 1 * H:2 * H])
        n = jnp.tanh(g_n + r * (gh[:, 2 * H:3 * H] + b_n))
        return (1.0 - z) * n + z * h

    h_f = h0_ref[0]                           # (B, H)
    h_b = h0_ref[1]                           # (B, H)

    # Fused fwd/bwd recurrence, fully unrolled (T static & small).
    for i in range(T):
        tf = i
        tb = T - 1 - i
        sf = slice(tf * B, (tf + 1) * B)      # sublane-aligned row slices (B=8)
        sb = slice(tb * B, (tb + 1) * B)
        hf_new = cell(gi_fr[sf], gi_fz[sf], gi_fn[sf], h_f, whh_f, bfn)
        hb_new = cell(gi_br[sb], gi_bz[sb], gi_bn[sb], h_b, whh_b, bbn)
        # packed-sequence semantics: freeze fwd once t >= len, skip bwd padded tail
        h_f = jnp.where(mask[tf], hf_new, h_f)
        h_b = jnp.where(mask[tb], hb_new, h_b)

    # Write the two halves directly (no in-kernel lane-concat).
    hs_ref[:, :H] = h_f
    hs_ref[:, H:] = h_b

    lin1 = (jnp.dot(h_f, w1f_ref[...], preferred_element_type=jnp.float32)
            + jnp.dot(h_b, w1b_ref[...], preferred_element_type=jnp.float32)
            + b1_ref[...])
    lin1 = jnp.maximum(lin1, 0.0)             # ReLU
    logits_ref[...] = (jnp.dot(lin1, w2_ref[...],
                               preferred_element_type=jnp.float32) + b2_ref[...])


# ----------------------- one-time parameter packing ------------------------ #
def prepare_params(params):
    """Fold the input projection into the embedding table and pre-split the
    head / hidden-to-hidden weights. Run ONCE; the jitted forward only does
    gather -> pad -> pallas_call."""
    H = params["whh_f"].shape[0]

    def fold(bih, bhh):   # r,z gates: bih+bhh ; n gate: bih only
        return jnp.concatenate([bih[:, :2 * H] + bhh[:, :2 * H], bih[:, 2 * H:]],
                               axis=1)

    wih_cat = jnp.concatenate([params["wih_f"], params["wih_b"]], axis=1)    # (E, 6H)
    gib = jnp.concatenate([fold(params["bih_f"], params["bhh_f"]),
                           fold(params["bih_b"], params["bhh_b"])], axis=1)  # (1, 6H)
    emb_proj = (params["embedding"].astype(jnp.float32) @ wih_cat + gib)     # (V, 6H)

    return {
        "emb_proj": emb_proj,
        "whh_f": params["whh_f"],
        "whh_b": params["whh_b"],
        "bfn": params["bhh_f"][:, 2 * H:],
        "bbn": params["bhh_b"][:, 2 * H:],
        "w1f": params["w1"][:H, :],
        "w1b": params["w1"][H:, :],
        "b1": params["b1"],
        "w2": params["w2"],
        "b2": params["b2"],
        "h0": params["h0"],
    }


# ------------------------------- wrapper ----------------------------------- #
@jax.jit
def two_sentence_forward(prepped, x, sent1_lengths, sent2_lengths):
    B, T = x.shape
    H = prepped["whh_f"].shape[0]
    C = prepped["w2"].shape[1]

    lengths = (sent1_lengths + sent2_lengths).astype(jnp.int32)
    # PyTorch applies init_hidden to the length-sorted batch and then unsorts
    # the hidden.  The masked recurrence does not need sorting, so instead of
    # gathering x / outputs we only permute h0 (example i gets h0[:, inv[i]]).
    inv = jnp.argsort(jnp.argsort(-lengths))
    h0_eff = prepped["h0"][:, inv, :]

    # pad batch to the 8-sublane granularity (padded rows have length 0)
    B_pad = ((B + 7) // 8) * 8
    pad = B_pad - B
    x_p = jnp.pad(x, ((0, pad), (0, 0)))
    lens_p = jnp.pad(lengths, (0, pad)).reshape(B_pad, 1)
    h0_p = jnp.pad(h0_eff, ((0, 0), (0, pad), (0, 0)))

    # time-major gather of the pre-projected gates, flattened to (T*B_pad, 6H)
    gi = jnp.take(prepped["emb_proj"], x_p.T, axis=0).reshape(T * B_pad, 6 * H)

    # advisory cost estimate (latency-bound tiny kernel; keeps XLA honest)
    flops = T * 2 * (2 * B_pad * H * 3 * H) + 2 * (2 * B_pad * H * 100) + 2 * B_pad * 100 * C
    transcendentals = T * 2 * (3 * B_pad * H)
    bytes_accessed = 4 * (T * B_pad * 6 * H + 2 * H * 3 * H + 2 * B_pad * H
                          + 2 * H * 100 + 100 * C + B_pad * (2 * H + C))

    vmem = pl.BlockSpec(memory_space=pltpu.MemorySpace.VMEM)
    hs_p, logits_p = pl.pallas_call(
        _bigru_head_kernel,
        out_shape=(jax.ShapeDtypeStruct((B_pad, 2 * H), jnp.float32),
                   jax.ShapeDtypeStruct((B_pad, C), jnp.float32)),
        in_specs=[vmem] * 12,
        out_specs=(vmem, vmem),
        cost_estimate=pl.CostEstimate(flops=flops,
                                      transcendentals=transcendentals,
                                      bytes_accessed=bytes_accessed),
    )(gi, lens_p, h0_p,
      prepped["whh_f"], prepped["whh_b"], prepped["bfn"], prepped["bbn"],
      prepped["w1f"], prepped["w1b"], prepped["b1"],
      prepped["w2"], prepped["b2"])

    return hs_p[:B], logits_p[:B]


# --------------------------- pure-JAX reference ----------------------------- #
def reference_forward(params, x, sent1_lengths, sent2_lengths):
    # Mirrors the PyTorch flow literally: sort by descending total length,
    # run the masked bidirectional GRU, unsort.
    lengths = (sent1_lengths + sent2_lengths).astype(jnp.int32)
    order = jnp.argsort(-lengths)
    inv = jnp.argsort(order)
    x_s = x[order]
    lens = lengths[order]
    embed = jnp.take(params["embedding"], x_s, axis=0).astype(jnp.float32)
    B, T, _ = embed.shape
    H = params["whh_f"].shape[0]
    lens_col = lens.reshape(B, 1)

    def cell(x_t, h, wih, whh, bih, bhh):
        gi = x_t @ wih + bih
        gh = h @ whh + bhh
        r = jax.nn.sigmoid(gi[:, :H] + gh[:, :H])
        z = jax.nn.sigmoid(gi[:, H:2 * H] + gh[:, H:2 * H])
        n = jnp.tanh(gi[:, 2 * H:] + r * gh[:, 2 * H:])
        return (1.0 - z) * n + z * h

    h_f = params["h0"][0]
    for t in range(T):
        h_new = cell(embed[:, t], h_f, params["wih_f"], params["whh_f"],
                     params["bih_f"], params["bhh_f"])
        h_f = jnp.where(t < lens_col, h_new, h_f)
    h_b = params["h0"][1]
    for t in range(T - 1, -1, -1):
        h_new = cell(embed[:, t], h_b, params["wih_b"], params["whh_b"],
                     params["bih_b"], params["bhh_b"])
        h_b = jnp.where(t < lens_col, h_new, h_b)

    hs = jnp.concatenate([h_f, h_b], axis=1)
    lin1 = jnp.maximum(hs @ params["w1"] + params["b1"], 0.0)
    logits = lin1 @ params["w2"] + params["b2"]
    return hs[inv], logits[inv]


# --------------------------------- main ------------------------------------ #
def init_params(key, vocab, emb_size, hidden_size, num_classes, batch_size):
    ks = jax.random.split(key, 16)
    H, E = hidden_size, emb_size
    u = lambda k, shape, s: jax.random.uniform(k, shape, jnp.float32, -s, s)
    s_gru = 1.0 / jnp.sqrt(H)
    params = {
        "embedding": jax.random.normal(ks[0], (vocab, E), jnp.float32) * 0.5,
        # GRU weights pre-transposed to (in, out); biases as (1, 3H)
        "wih_f": u(ks[1], (E, 3 * H), s_gru),
        "whh_f": u(ks[2], (H, 3 * H), s_gru),
        "bih_f": u(ks[3], (1, 3 * H), s_gru),
        "bhh_f": u(ks[4], (1, 3 * H), s_gru),
        "wih_b": u(ks[5], (E, 3 * H), s_gru),
        "whh_b": u(ks[6], (H, 3 * H), s_gru),
        "bih_b": u(ks[7], (1, 3 * H), s_gru),
        "bhh_b": u(ks[8], (1, 3 * H), s_gru),
        # linear1: (2H -> 100), linear2: (100 -> num_classes), pre-transposed
        "w1": u(ks[9], (2 * H, 100), 1.0 / jnp.sqrt(2 * H)),
        "b1": u(ks[10], (1, 100), 1.0 / jnp.sqrt(2 * H)),
        "w2": u(ks[11], (100, num_classes), 0.1),
        "b2": u(ks[12], (1, num_classes), 0.1),
        # init_hidden: torch.randn(2, batch, hidden) -- deterministic here
        "h0": jax.random.normal(ks[13], (2, batch_size, H), jnp.float32),
    }
    return params


if __name__ == "__main__":
    B, T, E, H, C, VOCAB = 4, 10, 64, 32, 3, 50

    key = jax.random.PRNGKey(0)
    k_par, k_x = jax.random.split(key)
    params = init_params(k_par, VOCAB, E, H, C, B)
    prepped = prepare_params(params)          # one-time packing, outside jit

    x = jax.random.randint(k_x, (B, T), 0, VOCAB, dtype=jnp.int32)
    sent1_lengths = jnp.array([3, 2, 4, 1], dtype=jnp.int32)
    sent2_lengths = jnp.array([4, 5, 2, 3], dtype=jnp.int32)   # totals <= T

    hs, logits = two_sentence_forward(prepped, x, sent1_lengths, sent2_lengths)
    jax.block_until_ready((hs, logits))

    hs_ref, logits_ref = reference_forward(params, x, sent1_lengths, sent2_lengths)
    assert hs.shape == (B, 2 * H) and logits.shape == (B, C)
    assert jnp.allclose(hs, hs_ref, rtol=2e-3, atol=2e-4), "hidden mismatch"
    assert jnp.allclose(logits, logits_ref, rtol=2e-3, atol=2e-4), "logits mismatch"

    print("KERNEL_OK")
</pallas_src>

<mosaic_0001>
module attributes {stable_mosaic.version = 11 : i64} {
  func.func @_bigru_head_kernel(%arg0: memref<80x192xf32, #tpu.memory_space<vmem>>, %arg1: memref<8x1xi32, #tpu.memory_space<vmem>>, %arg2: memref<2x8x32xf32, #tpu.memory_space<vmem>>, %arg3: memref<32x96xf32, #tpu.memory_space<vmem>>, %arg4: memref<32x96xf32, #tpu.memory_space<vmem>>, %arg5: memref<1x32xf32, #tpu.memory_space<vmem>>, %arg6: memref<1x32xf32, #tpu.memory_space<vmem>>, %arg7: memref<32x100xf32, #tpu.memory_space<vmem>>, %arg8: memref<32x100xf32, #tpu.memory_space<vmem>>, %arg9: memref<1x100xf32, #tpu.memory_space<vmem>>, %arg10: memref<100x3xf32, #tpu.memory_space<vmem>>, %arg11: memref<1x3xf32, #tpu.memory_space<vmem>>, %arg12: memref<8x64xf32, #tpu.memory_space<vmem>>, %arg13: memref<8x3xf32, #tpu.memory_space<vmem>>) attributes {dimension_semantics = [], scalar_prefetch = 0 : i64, scratch_operands = 0 : i64, tpu.core_type = #tpu.core_type<tc>} {
    %c0 = arith.constant 0 : index
    %c0_0 = arith.constant 0 : index
    %0 = vector.load %arg0[%c0, %c0_0] : memref<80x192xf32, #tpu.memory_space<vmem>>, vector<80x192xf32>
    %1 = vector.extract_strided_slice %0 {offsets = [0, 0], sizes = [80, 32], strides = [1, 1]} : vector<80x192xf32> to vector<80x32xf32>
    %2 = vector.extract_strided_slice %0 {offsets = [0, 32], sizes = [80, 32], strides = [1, 1]} : vector<80x192xf32> to vector<80x32xf32>
    %3 = vector.extract_strided_slice %0 {offsets = [0, 64], sizes = [80, 32], strides = [1, 1]} : vector<80x192xf32> to vector<80x32xf32>
    %4 = vector.extract_strided_slice %0 {offsets = [0, 96], sizes = [80, 32], strides = [1, 1]} : vector<80x192xf32> to vector<80x32xf32>
    %5 = vector.extract_strided_slice %0 {offsets = [0, 128], sizes = [80, 32], strides = [1, 1]} : vector<80x192xf32> to vector<80x32xf32>
    %6 = vector.extract_strided_slice %0 {offsets = [0, 160], sizes = [80, 32], strides = [1, 1]} : vector<80x192xf32> to vector<80x32xf32>
    %c0_1 = arith.constant 0 : index
    %c0_2 = arith.constant 0 : index
    %7 = vector.load %arg3[%c0_1, %c0_2] : memref<32x96xf32, #tpu.memory_space<vmem>>, vector<32x96xf32>
    %c0_3 = arith.constant 0 : index
    %c0_4 = arith.constant 0 : index
    %8 = vector.load %arg4[%c0_3, %c0_4] : memref<32x96xf32, #tpu.memory_space<vmem>>, vector<32x96xf32>
    %c0_5 = arith.constant 0 : index
    %c0_6 = arith.constant 0 : index
    %9 = vector.load %arg5[%c0_5, %c0_6] : memref<1x32xf32, #tpu.memory_space<vmem>>, vector<1x32xf32>
    %c0_7 = arith.constant 0 : index
    %c0_8 = arith.constant 0 : index
    %10 = vector.load %arg6[%c0_7, %c0_8] : memref<1x32xf32, #tpu.memory_space<vmem>>, vector<1x32xf32>
    %c0_9 = arith.constant 0 : index
    %c0_10 = arith.constant 0 : index
    %11 = vector.load %arg1[%c0_9, %c0_10] : memref<8x1xi32, #tpu.memory_space<vmem>>, vector<8x1xi32>
    %12 = tpu.iota {dimensions = array<i32: 0>} : vector<10x8x1xi32>
    %13 = vector.shape_cast %11 : vector<8x1xi32> to vector<1x8x1xi32>
    %14 = vector.broadcast %13 : vector<1x8x1xi32> to vector<10x8x1xi32>
    %15 = arith.cmpi slt, %12, %14 : vector<10x8x1xi32>
    %c0_11 = arith.constant 0 : index
    %c0_12 = arith.constant 0 : index
    %c0_13 = arith.constant 0 : index
    %16 = vector.load %arg2[%c0_11, %c0_12, %c0_13] : memref<2x8x32xf32, #tpu.memory_space<vmem>>, vector<1x8x32xf32>
    %17 = vector.shape_cast %16 : vector<1x8x32xf32> to vector<8x32xf32>
    %c1 = arith.constant 1 : index
    %c0_14 = arith.constant 0 : index
    %c0_15 = arith.constant 0 : index
    %18 = vector.load %arg2[%c1, %c0_14, %c0_15] : memref<2x8x32xf32, #tpu.memory_space<vmem>>, vector<1x8x32xf32>
    %19 = vector.shape_cast %18 : vector<1x8x32xf32> to vector<8x32xf32>
    %20 = vector.extract_strided_slice %1 {offsets = [0, 0], sizes = [8, 32], strides = [1, 1]} : vector<80x32xf32> to vector<8x32xf32>
    %21 = vector.extract_strided_slice %2 {offsets = [0, 0], sizes = [8, 32], strides = [1, 1]} : vector<80x32xf32> to vector<8x32xf32>
    %22 = vector.extract_strided_slice %3 {offsets = [0, 0], sizes = [8, 32], strides = [1, 1]} : vector<80x32xf32> to vector<8x32xf32>
    %cst = arith.constant dense<0.000000e+00> : vector<8x96xf32>
    %23 = tpu.matmul %17, %7, %cst {dimension_numbers = #tpu.dot_dimension_numbers<[1], [0], [0], [1], [0, 0, 1, 1], [], []>} : vector<8x32xf32>, vector<32x96xf32>, vector<8x96xf32> -> vector<8x96xf32>
    %24 = vector.extract_strided_slice %23 {offsets = [0, 0], sizes = [8, 32], strides = [1, 1]} : vector<8x96xf32> to vector<8x32xf32>
    %25 = arith.addf %20, %24 : vector<8x32xf32>
    %26 = arith.negf %25 : vector<8x32xf32>
    %27 = math.exp %26 : vector<8x32xf32>
    %cst_16 = arith.constant 1.000000e+00 : f32
    %28 = vector.broadcast %cst_16 : f32 to vector<8x32xf32>
    %29 = arith.addf %28, %27 : vector<8x32xf32>
    %30 = arith.divf %28, %29 : vector<8x32xf32>
    %31 = vector.extract_strided_slice %23 {offsets = [0, 32], sizes = [8, 32], strides = [1, 1]} : vector<8x96xf32> to vector<8x32xf32>
    %32 = arith.addf %21, %31 : vector<8x32xf32>
    %33 = arith.negf %32 : vector<8x32xf32>
    %34 = math.exp %33 : vector<8x32xf32>
    %cst_17 = arith.constant 1.000000e+00 : f32
    %35 = vector.broadcast %cst_17 : f32 to vector<8x32xf32>
    %36 = arith.addf %35, %34 : vector<8x32xf32>
    %37 = arith.divf %35, %36 : vector<8x32xf32>
    %38 = vector.extract_strided_slice %23 {offsets = [0, 64], sizes = [8, 32], strides = [1, 1]} : vector<8x96xf32> to vector<8x32xf32>
    %39 = vector.broadcast %9 : vector<1x32xf32> to vector<8x32xf32>
    %40 = arith.addf %38, %39 : vector<8x32xf32>
    %41 = arith.mulf %30, %40 : vector<8x32xf32>
    %42 = arith.addf %22, %41 : vector<8x32xf32>
    %43 = math.tanh %42 : vector<8x32xf32>
    %cst_18 = arith.constant 1.000000e+00 : f32
    %44 = vector.broadcast %cst_18 : f32 to vector<8x32xf32>
    %45 = arith.subf %44, %37 : vector<8x32xf32>
    %46 = arith.mulf %45, %43 : vector<8x32xf32>
    %47 = arith.mulf %37, %17 : vector<8x32xf32>
    %48 = arith.addf %46, %47 : vector<8x32xf32>
    %49 = vector.extract_strided_slice %4 {offsets = [72, 0], sizes = [8, 32], strides = [1, 1]} : vector<80x32xf32> to vector<8x32xf32>
    %50 = vector.extract_strided_slice %5 {offsets = [72, 0], sizes = [8, 32], strides = [1, 1]} : vector<80x32xf32> to vector<8x32xf32>
    %51 = vector.extract_strided_slice %6 {offsets = [72, 0], sizes = [8, 32], strides = [1, 1]} : vector<80x32xf32> to vector<8x32xf32>
    %cst_19 = arith.constant dense<0.000000e+00> : vector<8x96xf32>
    %52 = tpu.matmul %19, %8, %cst_19 {dimension_numbers = #tpu.dot_dimension_numbers<[1], [0], [0], [1], [0, 0, 1, 1], [], []>} : vector<8x32xf32>, vector<32x96xf32>, vector<8x96xf32> -> vector<8x96xf32>
    %53 = vector.extract_strided_slice %52 {offsets = [0, 0], sizes = [8, 32], strides = [1, 1]} : vector<8x96xf32> to vector<8x32xf32>
    %54 = arith.addf %49, %53 : vector<8x32xf32>
    %55 = arith.negf %54 : vector<8x32xf32>
    %56 = math.exp %55 : vector<8x32xf32>
    %cst_20 = arith.constant 1.000000e+00 : f32
    %57 = vector.broadcast %cst_20 : f32 to vector<8x32xf32>
    %58 = arith.addf %57, %56 : vector<8x32xf32>
    %59 = arith.divf %57, %58 : vector<8x32xf32>
    %60 = vector.extract_strided_slice %52 {offsets = [0, 32], sizes = [8, 32], strides = [1, 1]} : vector<8x96xf32> to vector<8x32xf32>
    %61 = arith.addf %50, %60 : vector<8x32xf32>
    %62 = arith.negf %61 : vector<8x32xf32>
    %63 = math.exp %62 : vector<8x32xf32>
    %cst_21 = arith.constant 1.000000e+00 : f32
    %64 = vector.broadcast %cst_21 : f32 to vector<8x32xf32>
    %65 = arith.addf %64, %63 : vector<8x32xf32>
    %66 = arith.divf %64, %65 : vector<8x32xf32>
    %67 = vector.extract_strided_slice %52 {offsets = [0, 64], sizes = [8, 32], strides = [1, 1]} : vector<8x96xf32> to vector<8x32xf32>
    %68 = vector.broadcast %10 : vector<1x32xf32> to vector<8x32xf32>
    %69 = arith.addf %67, %68 : vector<8x32xf32>
    %70 = arith.mulf %59, %69 : vector<8x32xf32>
    %71 = arith.addf %51, %70 : vector<8x32xf32>
    %72 = math.tanh %71 : vector<8x32xf32>
    %cst_22 = arith.constant 1.000000e+00 : f32
    %73 = vector.broadcast %cst_22 : f32 to vector<8x32xf32>
    %74 = arith.subf %73, %66 : vector<8x32xf32>
    %75 = arith.mulf %74, %72 : vector<8x32xf32>
    %76 = arith.mulf %66, %19 : vector<8x32xf32>
    %77 = arith.addf %75, %76 : vector<8x32xf32>
    %78 = vector.extract_strided_slice %15 {offsets = [0, 0, 0], sizes = [1, 8, 1], strides = [1, 1, 1]} : vector<10x8x1xi1> to vector<1x8x1xi1>
    %79 = vector.shape_cast %78 : vector<1x8x1xi1> to vector<8x1xi1>
    %80 = vector.shape_cast %79 : vector<8x1xi1> to vector<8x1xi1>
    %81 = vector.broadcast %80 : vector<8x1xi1> to vector<8x32xi1>
    %82 = arith.select %81, %48, %17 : vector<8x32xi1>, vector<8x32xf32>
    %83 = vector.extract_strided_slice %15 {offsets = [9, 0, 0], sizes = [1, 8, 1], strides = [1, 1, 1]} : vector<10x8x1xi1> to vector<1x8x1xi1>
    %84 = vector.shape_cast %83 : vector<1x8x1xi1> to vector<8x1xi1>
    %85 = vector.shape_cast %84 : vector<8x1xi1> to vector<8x1xi1>
    %86 = vector.broadcast %85 : vector<8x1xi1> to vector<8x32xi1>
    %87 = arith.select %86, %77, %19 : vector<8x32xi1>, vector<8x32xf32>
    %88 = vector.extract_strided_slice %1 {offsets = [8, 0], sizes = [8, 32], strides = [1, 1]} : vector<80x32xf32> to vector<8x32xf32>
    %89 = vector.extract_strided_slice %2 {offsets = [8, 0], sizes = [8, 32], strides = [1, 1]} : vector<80x32xf32> to vector<8x32xf32>
    %90 = vector.extract_strided_slice %3 {offsets = [8, 0], sizes = [8, 32], strides = [1, 1]} : vector<80x32xf32> to vector<8x32xf32>
    %cst_23 = arith.constant dense<0.000000e+00> : vector<8x96xf32>
    %91 = tpu.matmul %82, %7, %cst_23 {dimension_numbers = #tpu.dot_dimension_numbers<[1], [0], [0], [1], [0, 0, 1, 1], [], []>} : vector<8x32xf32>, vector<32x96xf32>, vector<8x96xf32> -> vector<8x96xf32>
    %92 = vector.extract_strided_slice %91 {offsets = [0, 0], sizes = [8, 32], strides = [1, 1]} : vector<8x96xf32> to vector<8x32xf32>
    %93 = arith.addf %88, %92 : vector<8x32xf32>
    %94 = arith.negf %93 : vector<8x32xf32>
    %95 = math.exp %94 : vector<8x32xf32>
    %cst_24 = arith.constant 1.000000e+00 : f32
    %96 = vector.broadcast %cst_24 : f32 to vector<8x32xf32>
    %97 = arith.addf %96, %95 : vector<8x32xf32>
    %98 = arith.divf %96, %97 : vector<8x32xf32>
    %99 = vector.extract_strided_slice %91 {offsets = [0, 32], sizes = [8, 32], strides = [1, 1]} : vector<8x96xf32> to vector<8x32xf32>
    %100 = arith.addf %89, %99 : vector<8x32xf32>
    %101 = arith.negf %100 : vector<8x32xf32>
    %102 = math.exp %101 : vector<8x32xf32>
    %cst_25 = arith.constant 1.000000e+00 : f32
    %103 = vector.broadcast %cst_25 : f32 to vector<8x32xf32>
    %104 = arith.addf %103, %102 : vector<8x32xf32>
    %105 = arith.divf %103, %104 : vector<8x32xf32>
    %106 = vector.extract_strided_slice %91 {offsets = [0, 64], sizes = [8, 32], strides = [1, 1]} : vector<8x96xf32> to vector<8x32xf32>
    %107 = vector.broadcast %9 : vector<1x32xf32> to vector<8x32xf32>
    %108 = arith.addf %106, %107 : vector<8x32xf32>
    %109 = arith.mulf %98, %108 : vector<8x32xf32>
    %110 = arith.addf %90, %109 : vector<8x32xf32>
    %111 = math.tanh %110 : vector<8x32xf32>
    %cst_26 = arith.constant 1.000000e+00 : f32
    %112 = vector.broadcast %cst_26 : f32 to vector<8x32xf32>
    %113 = arith.subf %112, %105 : vector<8x32xf32>
    %114 = arith.mulf %113, %111 : vector<8x32xf32>
    %115 = arith.mulf %105, %82 : vector<8x32xf32>
    %116 = arith.addf %114, %115 : vector<8x32xf32>
    %117 = vector.extract_strided_slice %4 {offsets = [64, 0], sizes = [8, 32], strides = [1, 1]} : vector<80x32xf32> to vector<8x32xf32>
    %118 = vector.extract_strided_slice %5 {offsets = [64, 0], sizes = [8, 32], strides = [1, 1]} : vector<80x32xf32> to vector<8x32xf32>
    %119 = vector.extract_strided_slice %6 {offsets = [64, 0], sizes = [8, 32], strides = [1, 1]} : vector<80x32xf32> to vector<8x32xf32>
    %cst_27 = arith.constant dense<0.000000e+00> : vector<8x96xf32>
    %120 = tpu.matmul %87, %8, %cst_27 {dimension_numbers = #tpu.dot_dimension_numbers<[1], [0], [0], [1], [0, 0, 1, 1], [], []>} : vector<8x32xf32>, vector<32x96xf32>, vector<8x96xf32> -> vector<8x96xf32>
    %121 = vector.extract_strided_slice %120 {offsets = [0, 0], sizes = [8, 32], strides = [1, 1]} : vector<8x96xf32> to vector<8x32xf32>
    %122 = arith.addf %117, %121 : vector<8x32xf32>
    %123 = arith.negf %122 : vector<8x32xf32>
    %124 = math.exp %123 : vector<8x32xf32>
    %cst_28 = arith.constant 1.000000e+00 : f32
    %125 = vector.broadcast %cst_28 : f32 to vector<8x32xf32>
    %126 = arith.addf %125, %124 : vector<8x32xf32>
    %127 = arith.divf %125, %126 : vector<8x32xf32>
    %128 = vector.extract_strided_slice %120 {offsets = [0, 32], sizes = [8, 32], strides = [1, 1]} : vector<8x96xf32> to vector<8x32xf32>
    %129 = arith.addf %118, %128 : vector<8x32xf32>
    %130 = arith.negf %129 : vector<8x32xf32>
    %131 = math.exp %130 : vector<8x32xf32>
    %cst_29 = arith.constant 1.000000e+00 : f32
    %132 = vector.broadcast %cst_29 : f32 to vector<8x32xf32>
    %133 = arith.addf %132, %131 : vector<8x32xf32>
    %134 = arith.divf %132, %133 : vector<8x32xf32>
    %135 = vector.extract_strided_slice %120 {offsets = [0, 64], sizes = [8, 32], strides = [1, 1]} : vector<8x96xf32> to vector<8x32xf32>
    %136 = vector.broadcast %10 : vector<1x32xf32> to vector<8x32xf32>
    %137 = arith.addf %135, %136 : vector<8x32xf32>
    %138 = arith.mulf %127, %137 : vector<8x32xf32>
    %139 = arith.addf %119, %138 : vector<8x32xf32>
    %140 = math.tanh %139 : vector<8x32xf32>
    %cst_30 = arith.constant 1.000000e+00 : f32
    %141 = vector.broadcast %cst_30 : f32 to vector<8x32xf32>
    %142 = arith.subf %141, %134 : vector<8x32xf32>
    %143 = arith.mulf %142, %140 : vector<8x32xf32>
    %144 = arith.mulf %134, %87 : vector<8x32xf32>
    %145 = arith.addf %143, %144 : vector<8x32xf32>
    %146 = vector.extract_strided_slice %15 {offsets = [1, 0, 0], sizes = [1, 8, 1], strides = [1, 1, 1]} : vector<10x8x1xi1> to vector<1x8x1xi1>
    %147 = vector.shape_cast %146 : vector<1x8x1xi1> to vector<8x1xi1>
    %148 = vector.shape_cast %147 : vector<8x1xi1> to vector<8x1xi1>
    %149 = vector.broadcast %148 : vector<8x1xi1> to vector<8x32xi1>
    %150 = arith.select %149, %116, %82 : vector<8x32xi1>, vector<8x32xf32>
    %151 = vector.extract_strided_slice %15 {offsets = [8, 0, 0], sizes = [1, 8, 1], strides = [1, 1, 1]} : vector<10x8x1xi1> to vector<1x8x1xi1>
    %152 = vector.shape_cast %151 : vector<1x8x1xi1> to vector<8x1xi1>
    %153 = vector.shape_cast %152 : vector<8x1xi1> to vector<8x1xi1>
    %154 = vector.broadcast %153 : vector<8x1xi1> to vector<8x32xi1>
    %155 = arith.select %154, %145, %87 : vector<8x32xi1>, vector<8x32xf32>
    %156 = vector.extract_strided_slice %1 {offsets = [16, 0], sizes = [8, 32], strides = [1, 1]} : vector<80x32xf32> to vector<8x32xf32>
    %157 = vector.extract_strided_slice %2 {offsets = [16, 0], sizes = [8, 32], strides = [1, 1]} : vector<80x32xf32> to vector<8x32xf32>
    %158 = vector.extract_strided_slice %3 {offsets = [16, 0], sizes = [8, 32], strides = [1, 1]} : vector<80x32xf32> to vector<8x32xf32>
    %cst_31 = arith.constant dense<0.000000e+00> : vector<8x96xf32>
    %159 = tpu.matmul %150, %7, %cst_31 {dimension_numbers = #tpu.dot_dimension_numbers<[1], [0], [0], [1], [0, 0, 1, 1], [], []>} : vector<8x32xf32>, vector<32x96xf32>, vector<8x96xf32> -> vector<8x96xf32>
    %160 = vector.extract_strided_slice %159 {offsets = [0, 0], sizes = [8, 32], strides = [1, 1]} : vector<8x96xf32> to vector<8x32xf32>
    %161 = arith.addf %156, %160 : vector<8x32xf32>
    %162 = arith.negf %161 : vector<8x32xf32>
    %163 = math.exp %162 : vector<8x32xf32>
    %cst_32 = arith.constant 1.000000e+00 : f32
    %164 = vector.broadcast %cst_32 : f32 to vector<8x32xf32>
    %165 = arith.addf %164, %163 : vector<8x32xf32>
    %166 = arith.divf %164, %165 : vector<8x32xf32>
    %167 = vector.extract_strided_slice %159 {offsets = [0, 32], sizes = [8, 32], strides = [1, 1]} : vector<8x96xf32> to vector<8x32xf32>
    %168 = arith.addf %157, %167 : vector<8x32xf32>
    %169 = arith.negf %168 : vector<8x32xf32>
    %170 = math.exp %169 : vector<8x32xf32>
    %cst_33 = arith.constant 1.000000e+00 : f32
    %171 = vector.broadcast %cst_33 : f32 to vector<8x32xf32>
    %172 = arith.addf %171, %170 : vector<8x32xf32>
    %173 = arith.divf %171, %172 : vector<8x32xf32>
    %174 = vector.extract_strided_slice %159 {offsets = [0, 64], sizes = [8, 32], strides = [1, 1]} : vector<8x96xf32> to vector<8x32xf32>
    %175 = vector.broadcast %9 : vector<1x32xf32> to vector<8x32xf32>
    %176 = arith.addf %174, %175 : vector<8x32xf32>
    %177 = arith.mulf %166, %176 : vector<8x32xf32>
    %178 = arith.addf %158, %177 : vector<8x32xf32>
    %179 = math.tanh %178 : vector<8x32xf32>
    %cst_34 = arith.constant 1.000000e+00 : f32
    %180 = vector.broadcast %cst_34 : f32 to vector<8x32xf32>
    %181 = arith.subf %180, %173 : vector<8x32xf32>
    %182 = arith.mulf %181, %179 : vector<8x32xf32>
    %183 = arith.mulf %173, %150 : vector<8x32xf32>
    %184 = arith.addf %182, %183 : vector<8x32xf32>
    %185 = vector.extract_strided_slice %4 {offsets = [56, 0], sizes = [8, 32], strides = [1, 1]} : vector<80x32xf32> to vector<8x32xf32>
    %186 = vector.extract_strided_slice %5 {offsets = [56, 0], sizes = [8, 32], strides = [1, 1]} : vector<80x32xf32> to vector<8x32xf32>
    %187 = vector.extract_strided_slice %6 {offsets = [56, 0], sizes = [8, 32], strides = [1, 1]} : vector<80x32xf32> to vector<8x32xf32>
    %cst_35 = arith.constant dense<0.000000e+00> : vector<8x96xf32>
    %188 = tpu.matmul %155, %8, %cst_35 {dimension_numbers = #tpu.dot_dimension_numbers<[1], [0], [0], [1], [0, 0, 1, 1], [], []>} : vector<8x32xf32>, vector<32x96xf32>, vector<8x96xf32> -> vector<8x96xf32>
    %189 = vector.extract_strided_slice %188 {offsets = [0, 0], sizes = [8, 32], strides = [1, 1]} : vector<8x96xf32> to vector<8x32xf32>
    %190 = arith.addf %185, %189 : vector<8x32xf32>
    %191 = arith.negf %190 : vector<8x32xf32>
    %192 = math.exp %191 : vector<8x32xf32>
    %cst_36 = arith.constant 1.000000e+00 : f32
    %193 = vector.broadcast %cst_36 : f32 to vector<8x32xf32>
    %194 = arith.addf %193, %192 : vector<8x32xf32>
    %195 = arith.divf %193, %194 : vector<8x32xf32>
    %196 = vector.extract_strided_slice %188 {offsets = [0, 32], sizes = [8, 32], strides = [1, 1]} : vector<8x96xf32> to vector<8x32xf32>
    %197 = arith.addf %186, %196 : vector<8x32xf32>
    %198 = arith.negf %197 : vector<8x32xf32>
    %199 = math.exp %198 : vector<8x32xf32>
    %cst_37 = arith.constant 1.000000e+00 : f32
    %200 = vector.broadcast %cst_37 : f32 to vector<8x32xf32>
    %201 = arith.addf %200, %199 : vector<8x32xf32>
    %202 = arith.divf %200, %201 : vector<8x32xf32>
    %203 = vector.extract_strided_slice %188 {offsets = [0, 64], sizes = [8, 32], strides = [1, 1]} : vector<8x96xf32> to vector<8x32xf32>
    %204 = vector.broadcast %10 : vector<1x32xf32> to vector<8x32xf32>
    %205 = arith.addf %203, %204 : vector<8x32xf32>
    %206 = arith.mulf %195, %205 : vector<8x32xf32>
    %207 = arith.addf %187, %206 : vector<8x32xf32>
    %208 = math.tanh %207 : vector<8x32xf32>
    %cst_38 = arith.constant 1.000000e+00 : f32
    %209 = vector.broadcast %cst_38 : f32 to vector<8x32xf32>
    %210 = arith.subf %209, %202 : vector<8x32xf32>
    %211 = arith.mulf %210, %208 : vector<8x32xf32>
    %212 = arith.mulf %202, %155 : vector<8x32xf32>
    %213 = arith.addf %211, %212 : vector<8x32xf32>
    %214 = vector.extract_strided_slice %15 {offsets = [2, 0, 0], sizes = [1, 8, 1], strides = [1, 1, 1]} : vector<10x8x1xi1> to vector<1x8x1xi1>
    %215 = vector.shape_cast %214 : vector<1x8x1xi1> to vector<8x1xi1>
    %216 = vector.shape_cast %215 : vector<8x1xi1> to vector<8x1xi1>
    %217 = vector.broadcast %216 : vector<8x1xi1> to vector<8x32xi1>
    %218 = arith.select %217, %184, %150 : vector<8x32xi1>, vector<8x32xf32>
    %219 = vector.extract_strided_slice %15 {offsets = [7, 0, 0], sizes = [1, 8, 1], strides = [1, 1, 1]} : vector<10x8x1xi1> to vector<1x8x1xi1>
    %220 = vector.shape_cast %219 : vector<1x8x1xi1> to vector<8x1xi1>
    %221 = vector.shape_cast %220 : vector<8x1xi1> to vector<8x1xi1>
    %222 = vector.broadcast %221 : vector<8x1xi1> to vector<8x32xi1>
    %223 = arith.select %222, %213, %155 : vector<8x32xi1>, vector<8x32xf32>
    %224 = vector.extract_strided_slice %1 {offsets = [24, 0], sizes = [8, 32], strides = [1, 1]} : vector<80x32xf32> to vector<8x32xf32>
    %225 = vector.extract_strided_slice %2 {offsets = [24, 0], sizes = [8, 32], strides = [1, 1]} : vector<80x32xf32> to vector<8x32xf32>
    %226 = vector.extract_strided_slice %3 {offsets = [24, 0], sizes = [8, 32], strides = [1, 1]} : vector<80x32xf32> to vector<8x32xf32>
    %cst_39 = arith.constant dense<0.000000e+00> : vector<8x96xf32>
    %227 = tpu.matmul %218, %7, %cst_39 {dimension_numbers = #tpu.dot_dimension_numbers<[1], [0], [0], [1], [0, 0, 1, 1], [], []>} : vector<8x32xf32>, vector<32x96xf32>, vector<8x96xf32> -> vector<8x96xf32>
    %228 = vector.extract_strided_slice %227 {offsets = [0, 0], sizes = [8, 32], strides = [1, 1]} : vector<8x96xf32> to vector<8x32xf32>
    %229 = arith.addf %224, %228 : vector<8x32xf32>
    %230 = arith.negf %229 : vector<8x32xf32>
    %231 = math.exp %230 : vector<8x32xf32>
    %cst_40 = arith.constant 1.000000e+00 : f32
    %232 = vector.broadcast %cst_40 : f32 to vector<8x32xf32>
    %233 = arith.addf %232, %231 : vector<8x32xf32>
    %234 = arith.divf %232, %233 : vector<8x32xf32>
    %235 = vector.extract_strided_slice %227 {offsets = [0, 32], sizes = [8, 32], strides = [1, 1]} : vector<8x96xf32> to vector<8x32xf32>
    %236 = arith.addf %225, %235 : vector<8x32xf32>
    %237 = arith.negf %236 : vector<8x32xf32>
    %238 = math.exp %237 : vector<8x32xf32>
    %cst_41 = arith.constant 1.000000e+00 : f32
    %239 = vector.broadcast %cst_41 : f32 to vector<8x32xf32>
    %240 = arith.addf %239, %238 : vector<8x32xf32>
    %241 = arith.divf %239, %240 : vector<8x32xf32>
    %242 = vector.extract_strided_slice %227 {offsets = [0, 64], sizes = [8, 32], strides = [1, 1]} : vector<8x96xf32> to vector<8x32xf32>
    %243 = vector.broadcast %9 : vector<1x32xf32> to vector<8x32xf32>
    %244 = arith.addf %242, %243 : vector<8x32xf32>
    %245 = arith.mulf %234, %244 : vector<8x32xf32>
    %246 = arith.addf %226, %245 : vector<8x32xf32>
    %247 = math.tanh %246 : vector<8x32xf32>
    %cst_42 = arith.constant 1.000000e+00 : f32
    %248 = vector.broadcast %cst_42 : f32 to vector<8x32xf32>
    %249 = arith.subf %248, %241 : vector<8x32xf32>
    %250 = arith.mulf %249, %247 : vector<8x32xf32>
    %251 = arith.mulf %241, %218 : vector<8x32xf32>
    %252 = arith.addf %250, %251 : vector<8x32xf32>
    %253 = vector.extract_strided_slice %4 {offsets = [48, 0], sizes = [8, 32], strides = [1, 1]} : vector<80x32xf32> to vector<8x32xf32>
    %254 = vector.extract_strided_slice %5 {offsets = [48, 0], sizes = [8, 32], strides = [1, 1]} : vector<80x32xf32> to vector<8x32xf32>
    %255 = vector.extract_strided_slice %6 {offsets = [48, 0], sizes = [8, 32], strides = [1, 1]} : vector<80x32xf32> to vector<8x32xf32>
    %cst_43 = arith.constant dense<0.000000e+00> : vector<8x96xf32>
    %256 = tpu.matmul %223, %8, %cst_43 {dimension_numbers = #tpu.dot_dimension_numbers<[1], [0], [0], [1], [0, 0, 1, 1], [], []>} : vector<8x32xf32>, vector<32x96xf32>, vector<8x96xf32> -> vector<8x96xf32>
    %257 = vector.extract_strided_slice %256 {offsets = [0, 0], sizes = [8, 32], strides = [1, 1]} : vector<8x96xf32> to vector<8x32xf32>
    %258 = arith.addf %253, %257 : vector<8x32xf32>
    %259 = arith.negf %258 : vector<8x32xf32>
    %260 = math.exp %259 : vector<8x32xf32>
    %cst_44 = arith.constant 1.000000e+00 : f32
    %261 = vector.broadcast %cst_44 : f32 to vector<8x32xf32>
    %262 = arith.addf %261, %260 : vector<8x32xf32>
    %263 = arith.divf %261, %262 : vector<8x32xf32>
    %264 = vector.extract_strided_slice %256 {offsets = [0, 32], sizes = [8, 32], strides = [1, 1]} : vector<8x96xf32> to vector<8x32xf32>
    %265 = arith.addf %254, %264 : vector<8x32xf32>
    %266 = arith.negf %265 : vector<8x32xf32>
    %267 = math.exp %266 : vector<8x32xf32>
    %cst_45 = arith.constant 1.000000e+00 : f32
    %268 = vector.broadcast %cst_45 : f32 to vector<8x32xf32>
    %269 = arith.addf %268, %267 : vector<8x32xf32>
    %270 = arith.divf %268, %269 : vector<8x32xf32>
    %271 = vector.extract_strided_slice %256 {offsets = [0, 64], sizes = [8, 32], strides = [1, 1]} : vector<8x96xf32> to vector<8x32xf32>
    %272 = vector.broadcast %10 : vector<1x32xf32> to vector<8x32xf32>
    %273 = arith.addf %271, %272 : vector<8x32xf32>
    %274 = arith.mulf %263, %273 : vector<8x32xf32>
    %275 = arith.addf %255, %274 : vector<8x32xf32>
    %276 = math.tanh %275 : vector<8x32xf32>
    %cst_46 = arith.constant 1.000000e+00 : f32
    %277 = vector.broadcast %cst_46 : f32 to vector<8x32xf32>
    %278 = arith.subf %277, %270 : vector<8x32xf32>
    %279 = arith.mulf %278, %276 : vector<8x32xf32>
    %280 = arith.mulf %270, %223 : vector<8x32xf32>
    %281 = arith.addf %279, %280 : vector<8x32xf32>
    %282 = vector.extract_strided_slice %15 {offsets = [3, 0, 0], sizes = [1, 8, 1], strides = [1, 1, 1]} : vector<10x8x1xi1> to vector<1x8x1xi1>
    %283 = vector.shape_cast %282 : vector<1x8x1xi1> to vector<8x1xi1>
    %284 = vector.shape_cast %283 : vector<8x1xi1> to vector<8x1xi1>
    %285 = vector.broadcast %284 : vector<8x1xi1> to vector<8x32xi1>
    %286 = arith.select %285, %252, %218 : vector<8x32xi1>, vector<8x32xf32>
    %287 = vector.extract_strided_slice %15 {offsets = [6, 0, 0], sizes = [1, 8, 1], strides = [1, 1, 1]} : vector<10x8x1xi1> to vector<1x8x1xi1>
    %288 = vector.shape_cast %287 : vector<1x8x1xi1> to vector<8x1xi1>
    %289 = vector.shape_cast %288 : vector<8x1xi1> to vector<8x1xi1>
    %290 = vector.broadcast %289 : vector<8x1xi1> to vector<8x32xi1>
    %291 = arith.select %290, %281, %223 : vector<8x32xi1>, vector<8x32xf32>
    %292 = vector.extract_strided_slice %1 {offsets = [32, 0], sizes = [8, 32], strides = [1, 1]} : vector<80x32xf32> to vector<8x32xf32>
    %293 = vector.extract_strided_slice %2 {offsets = [32, 0], sizes = [8, 32], strides = [1, 1]} : vector<80x32xf32> to vector<8x32xf32>
    %294 = vector.extract_strided_slice %3 {offsets = [32, 0], sizes = [8, 32], strides = [1, 1]} : vector<80x32xf32> to vector<8x32xf32>
    %cst_47 = arith.constant dense<0.000000e+00> : vector<8x96xf32>
    %295 = tpu.matmul %286, %7, %cst_47 {dimension_numbers = #tpu.dot_dimension_numbers<[1], [0], [0], [1], [0, 0, 1, 1], [], []>} : vector<8x32xf32>, vector<32x96xf32>, vector<8x96xf32> -> vector<8x96xf32>
    %296 = vector.extract_strided_slice %295 {offsets = [0, 0], sizes = [8, 32], strides = [1, 1]} : vector<8x96xf32> to vector<8x32xf32>
    %297 = arith.addf %292, %296 : vector<8x32xf32>
    %298 = arith.negf %297 : vector<8x32xf32>
    %299 = math.exp %298 : vector<8x32xf32>
    %cst_48 = arith.constant 1.000000e+00 : f32
    %300 = vector.broadcast %cst_48 : f32 to vector<8x32xf32>
    %301 = arith.addf %300, %299 : vector<8x32xf32>
    %302 = arith.divf %300, %301 : vector<8x32xf32>
    %303 = vector.extract_strided_slice %295 {offsets = [0, 32], sizes = [8, 32], strides = [1, 1]} : vector<8x96xf32> to vector<8x32xf32>
    %304 = arith.addf %293, %303 : vector<8x32xf32>
    %305 = arith.negf %304 : vector<8x32xf32>
    %306 = math.exp %305 : vector<8x32xf32>
    %cst_49 = arith.constant 1.000000e+00 : f32
    %307 = vector.broadcast %cst_49 : f32 to vector<8x32xf32>
    %308 = arith.addf %307, %306 : vector<8x32xf32>
    %309 = arith.divf %307, %308 : vector<8x32xf32>
    %310 = vector.extract_strided_slice %295 {offsets = [0, 64], sizes = [8, 32], strides = [1, 1]} : vector<8x96xf32> to vector<8x32xf32>
    %311 = vector.broadcast %9 : vector<1x32xf32> to vector<8x32xf32>
    %312 = arith.addf %310, %311 : vector<8x32xf32>
    %313 = arith.mulf %302, %312 : vector<8x32xf32>
    %314 = arith.addf %294, %313 : vector<8x32xf32>
    %315 = math.tanh %314 : vector<8x32xf32>
    %cst_50 = arith.constant 1.000000e+00 : f32
    %316 = vector.broadcast %cst_50 : f32 to vector<8x32xf32>
    %317 = arith.subf %316, %309 : vector<8x32xf32>
    %318 = arith.mulf %317, %315 : vector<8x32xf32>
    %319 = arith.mulf %309, %286 : vector<8x32xf32>
    %320 = arith.addf %318, %319 : vector<8x32xf32>
    %321 = vector.extract_strided_slice %4 {offsets = [40, 0], sizes = [8, 32], strides = [1, 1]} : vector<80x32xf32> to vector<8x32xf32>
    %322 = vector.extract_strided_slice %5 {offsets = [40, 0], sizes = [8, 32], strides = [1, 1]} : vector<80x32xf32> to vector<8x32xf32>
    %323 = vector.extract_strided_slice %6 {offsets = [40, 0], sizes = [8, 32], strides = [1, 1]} : vector<80x32xf32> to vector<8x32xf32>
    %cst_51 = arith.constant dense<0.000000e+00> : vector<8x96xf32>
    %324 = tpu.matmul %291, %8, %cst_51 {dimension_numbers = #tpu.dot_dimension_numbers<[1], [0], [0], [1], [0, 0, 1, 1], [], []>} : vector<8x32xf32>, vector<32x96xf32>, vector<8x96xf32> -> vector<8x96xf32>
    %325 = vector.extract_strided_slice %324 {offsets = [0, 0], sizes = [8, 32], strides = [1, 1]} : vector<8x96xf32> to vector<8x32xf32>
    %326 = arith.addf %321, %325 : vector<8x32xf32>
    %327 = arith.negf %326 : vector<8x32xf32>
    %328 = math.exp %327 : vector<8x32xf32>
    %cst_52 = arith.constant 1.000000e+00 : f32
    %329 = vector.broadcast %cst_52 : f32 to vector<8x32xf32>
    %330 = arith.addf %329, %328 : vector<8x32xf32>
    %331 = arith.divf %329, %330 : vector<8x32xf32>
    %332 = vector.extract_strided_slice %324 {offsets = [0, 32], sizes = [8, 32], strides = [1, 1]} : vector<8x96xf32> to vector<8x32xf32>
    %333 = arith.addf %322, %332 : vector<8x32xf32>
    %334 = arith.negf %333 : vector<8x32xf32>
    %335 = math.exp %334 : vector<8x32xf32>
    %cst_53 = arith.constant 1.000000e+00 : f32
    %336 = vector.broadcast %cst_53 : f32 to vector<8x32xf32>
    %337 = arith.addf %336, %335 : vector<8x32xf32>
    %338 = arith.divf %336, %337 : vector<8x32xf32>
    %339 = vector.extract_strided_slice %324 {offsets = [0, 64], sizes = [8, 32], strides = [1, 1]} : vector<8x96xf32> to vector<8x32xf32>
    %340 = vector.broadcast %10 : vector<1x32xf32> to vector<8x32xf32>
    %341 = arith.addf %339, %340 : vector<8x32xf32>
    %342 = arith.mulf %331, %341 : vector<8x32xf32>
    %343 = arith.addf %323, %342 : vector<8x32xf32>
    %344 = math.tanh %343 : vector<8x32xf32>
    %cst_54 = arith.constant 1.000000e+00 : f32
    %345 = vector.broadcast %cst_54 : f32 to vector<8x32xf32>
    %346 = arith.subf %345, %338 : vector<8x32xf32>
    %347 = arith.mulf %346, %344 : vector<8x32xf32>
    %348 = arith.mulf %338, %291 : vector<8x32xf32>
    %349 = arith.addf %347, %348 : vector<8x32xf32>
    %350 = vector.extract_strided_slice %15 {offsets = [4, 0, 0], sizes = [1, 8, 1], strides = [1, 1, 1]} : vector<10x8x1xi1> to vector<1x8x1xi1>
    %351 = vector.shape_cast %350 : vector<1x8x1xi1> to vector<8x1xi1>
    %352 = vector.shape_cast %351 : vector<8x1xi1> to vector<8x1xi1>
    %353 = vector.broadcast %352 : vector<8x1xi1> to vector<8x32xi1>
    %354 = arith.select %353, %320, %286 : vector<8x32xi1>, vector<8x32xf32>
    %355 = vector.extract_strided_slice %15 {offsets = [5, 0, 0], sizes = [1, 8, 1], strides = [1, 1, 1]} : vector<10x8x1xi1> to vector<1x8x1xi1>
    %356 = vector.shape_cast %355 : vector<1x8x1xi1> to vector<8x1xi1>
    %357 = vector.shape_cast %356 : vector<8x1xi1> to vector<8x1xi1>
    %358 = vector.broadcast %357 : vector<8x1xi1> to vector<8x32xi1>
    %359 = arith.select %358, %349, %291 : vector<8x32xi1>, vector<8x32xf32>
    %360 = vector.extract_strided_slice %1 {offsets = [40, 0], sizes = [8, 32], strides = [1, 1]} : vector<80x32xf32> to vector<8x32xf32>
    %361 = vector.extract_strided_slice %2 {offsets = [40, 0], sizes = [8, 32], strides = [1, 1]} : vector<80x32xf32> to vector<8x32xf32>
    %362 = vector.extract_strided_slice %3 {offsets = [40, 0], sizes = [8, 32], strides = [1, 1]} : vector<80x32xf32> to vector<8x32xf32>
    %cst_55 = arith.constant dense<0.000000e+00> : vector<8x96xf32>
    %363 = tpu.matmul %354, %7, %cst_55 {dimension_numbers = #tpu.dot_dimension_numbers<[1], [0], [0], [1], [0, 0, 1, 1], [], []>} : vector<8x32xf32>, vector<32x96xf32>, vector<8x96xf32> -> vector<8x96xf32>
    %364 = vector.extract_strided_slice %363 {offsets = [0, 0], sizes = [8, 32], strides = [1, 1]} : vector<8x96xf32> to vector<8x32xf32>
    %365 = arith.addf %360, %364 : vector<8x32xf32>
    %366 = arith.negf %365 : vector<8x32xf32>
    %367 = math.exp %366 : vector<8x32xf32>
    %cst_56 = arith.constant 1.000000e+00 : f32
    %368 = vector.broadcast %cst_56 : f32 to vector<8x32xf32>
    %369 = arith.addf %368, %367 : vector<8x32xf32>
    %370 = arith.divf %368, %369 : vector<8x32xf32>
    %371 = vector.extract_strided_slice %363 {offsets = [0, 32], sizes = [8, 32], strides = [1, 1]} : vector<8x96xf32> to vector<8x32xf32>
    %372 = arith.addf %361, %371 : vector<8x32xf32>
    %373 = arith.negf %372 : vector<8x32xf32>
    %374 = math.exp %373 : vector<8x32xf32>
    %cst_57 = arith.constant 1.000000e+00 : f32
    %375 = vector.broadcast %cst_57 : f32 to vector<8x32xf32>
    %376 = arith.addf %375, %374 : vector<8x32xf32>
    %377 = arith.divf %375, %376 : vector<8x32xf32>
    %378 = vector.extract_strided_slice %363 {offsets = [0, 64], sizes = [8, 32], strides = [1, 1]} : vector<8x96xf32> to vector<8x32xf32>
    %379 = vector.broadcast %9 : vector<1x32xf32> to vector<8x32xf32>
    %380 = arith.addf %378, %379 : vector<8x32xf32>
    %381 = arith.mulf %370, %380 : vector<8x32xf32>
    %382 = arith.addf %362, %381 : vector<8x32xf32>
    %383 = math.tanh %382 : vector<8x32xf32>
    %cst_58 = arith.constant 1.000000e+00 : f32
    %384 = vector.broadcast %cst_58 : f32 to vector<8x32xf32>
    %385 = arith.subf %384, %377 : vector<8x32xf32>
    %386 = arith.mulf %385, %383 : vector<8x32xf32>
    %387 = arith.mulf %377, %354 : vector<8x32xf32>
    %388 = arith.addf %386, %387 : vector<8x32xf32>
    %389 = vector.extract_strided_slice %4 {offsets = [32, 0], sizes = [8, 32], strides = [1, 1]} : vector<80x32xf32> to vector<8x32xf32>
    %390 = vector.extract_strided_slice %5 {offsets = [32, 0], sizes = [8, 32], strides = [1, 1]} : vector<80x32xf32> to vector<8x32xf32>
    %391 = vector.extract_strided_slice %6 {offsets = [32, 0], sizes = [8, 32], strides = [1, 1]} : vector<80x32xf32> to vector<8x32xf32>
    %cst_59 = arith.constant dense<0.000000e+00> : vector<8x96xf32>
    %392 = tpu.matmul %359, %8, %cst_59 {dimension_numbers = #tpu.dot_dimension_numbers<[1], [0], [0], [1], [0, 0, 1, 1], [], []>} : vector<8x32xf32>, vector<32x96xf32>, vector<8x96xf32> -> vector<8x96xf32>
    %393 = vector.extract_strided_slice %392 {offsets = [0, 0], sizes = [8, 32], strides = [1, 1]} : vector<8x96xf32> to vector<8x32xf32>
    %394 = arith.addf %389, %393 : vector<8x32xf32>
    %395 = arith.negf %394 : vector<8x32xf32>
    %396 = math.exp %395 : vector<8x32xf32>
    %cst_60 = arith.constant 1.000000e+00 : f32
    %397 = vector.broadcast %cst_60 : f32 to vector<8x32xf32>
    %398 = arith.addf %397, %396 : vector<8x32xf32>
    %399 = arith.divf %397, %398 : vector<8x32xf32>
    %400 = vector.extract_strided_slice %392 {offsets = [0, 32], sizes = [8, 32], strides = [1, 1]} : vector<8x96xf32> to vector<8x32xf32>
    %401 = arith.addf %390, %400 : vector<8x32xf32>
    %402 = arith.negf %401 : vector<8x32xf32>
    %403 = math.exp %402 : vector<8x32xf32>
    %cst_61 = arith.constant 1.000000e+00 : f32
    %404 = vector.broadcast %cst_61 : f32 to vector<8x32xf32>
    %405 = arith.addf %404, %403 : vector<8x32xf32>
    %406 = arith.divf %404, %405 : vector<8x32xf32>
    %407 = vector.extract_strided_slice %392 {offsets = [0, 64], sizes = [8, 32], strides = [1, 1]} : vector<8x96xf32> to vector<8x32xf32>
    %408 = vector.broadcast %10 : vector<1x32xf32> to vector<8x32xf32>
    %409 = arith.addf %407, %408 : vector<8x32xf32>
    %410 = arith.mulf %399, %409 : vector<8x32xf32>
    %411 = arith.addf %391, %410 : vector<8x32xf32>
    %412 = math.tanh %411 : vector<8x32xf32>
    %cst_62 = arith.constant 1.000000e+00 : f32
    %413 = vector.broadcast %cst_62 : f32 to vector<8x32xf32>
    %414 = arith.subf %413, %406 : vector<8x32xf32>
    %415 = arith.mulf %414, %412 : vector<8x32xf32>
    %416 = arith.mulf %406, %359 : vector<8x32xf32>
    %417 = arith.addf %415, %416 : vector<8x32xf32>
    %418 = vector.extract_strided_slice %15 {offsets = [5, 0, 0], sizes = [1, 8, 1], strides = [1, 1, 1]} : vector<10x8x1xi1> to vector<1x8x1xi1>
    %419 = vector.shape_cast %418 : vector<1x8x1xi1> to vector<8x1xi1>
    %420 = vector.shape_cast %419 : vector<8x1xi1> to vector<8x1xi1>
    %421 = vector.broadcast %420 : vector<8x1xi1> to vector<8x32xi1>
    %422 = arith.select %421, %388, %354 : vector<8x32xi1>, vector<8x32xf32>
    %423 = vector.extract_strided_slice %15 {offsets = [4, 0, 0], sizes = [1, 8, 1], strides = [1, 1, 1]} : vector<10x8x1xi1> to vector<1x8x1xi1>
    %424 = vector.shape_cast %423 : vector<1x8x1xi1> to vector<8x1xi1>
    %425 = vector.shape_cast %424 : vector<8x1xi1> to vector<8x1xi1>
    %426 = vector.broadcast %425 : vector<8x1xi1> to vector<8x32xi1>
    %427 = arith.select %426, %417, %359 : vector<8x32xi1>, vector<8x32xf32>
    %428 = vector.extract_strided_slice %1 {offsets = [48, 0], sizes = [8, 32], strides = [1, 1]} : vector<80x32xf32> to vector<8x32xf32>
    %429 = vector.extract_strided_slice %2 {offsets = [48, 0], sizes = [8, 32], strides = [1, 1]} : vector<80x32xf32> to vector<8x32xf32>
    %430 = vector.extract_strided_slice %3 {offsets = [48, 0], sizes = [8, 32], strides = [1, 1]} : vector<80x32xf32> to vector<8x32xf32>
    %cst_63 = arith.constant dense<0.000000e+00> : vector<8x96xf32>
    %431 = tpu.matmul %422, %7, %cst_63 {dimension_numbers = #tpu.dot_dimension_numbers<[1], [0], [0], [1], [0, 0, 1, 1], [], []>} : vector<8x32xf32>, vector<32x96xf32>, vector<8x96xf32> -> vector<8x96xf32>
    %432 = vector.extract_strided_slice %431 {offsets = [0, 0], sizes = [8, 32], strides = [1, 1]} : vector<8x96xf32> to vector<8x32xf32>
    %433 = arith.addf %428, %432 : vector<8x32xf32>
    %434 = arith.negf %433 : vector<8x32xf32>
    %435 = math.exp %434 : vector<8x32xf32>
    %cst_64 = arith.constant 1.000000e+00 : f32
    %436 = vector.broadcast %cst_64 : f32 to vector<8x32xf32>
    %437 = arith.addf %436, %435 : vector<8x32xf32>
    %438 = arith.divf %436, %437 : vector<8x32xf32>
    %439 = vector.extract_strided_slice %431 {offsets = [0, 32], sizes = [8, 32], strides = [1, 1]} : vector<8x96xf32> to vector<8x32xf32>
    %440 = arith.addf %429, %439 : vector<8x32xf32>
    %441 = arith.negf %440 : vector<8x32xf32>
    %442 = math.exp %441 : vector<8x32xf32>
    %cst_65 = arith.constant 1.000000e+00 : f32
    %443 = vector.broadcast %cst_65 : f32 to vector<8x32xf32>
    %444 = arith.addf %443, %442 : vector<8x32xf32>
    %445 = arith.divf %443, %444 : vector<8x32xf32>
    %446 = vector.extract_strided_slice %431 {offsets = [0, 64], sizes = [8, 32], strides = [1, 1]} : vector<8x96xf32> to vector<8x32xf32>
    %447 = vector.broadcast %9 : vector<1x32xf32> to vector<8x32xf32>
    %448 = arith.addf %446, %447 : vector<8x32xf32>
    %449 = arith.mulf %438, %448 : vector<8x32xf32>
    %450 = arith.addf %430, %449 : vector<8x32xf32>
    %451 = math.tanh %450 : vector<8x32xf32>
    %cst_66 = arith.constant 1.000000e+00 : f32
    %452 = vector.broadcast %cst_66 : f32 to vector<8x32xf32>
    %453 = arith.subf %452, %445 : vector<8x32xf32>
    %454 = arith.mulf %453, %451 : vector<8x32xf32>
    %455 = arith.mulf %445, %422 : vector<8x32xf32>
    %456 = arith.addf %454, %455 : vector<8x32xf32>
    %457 = vector.extract_strided_slice %4 {offsets = [24, 0], sizes = [8, 32], strides = [1, 1]} : vector<80x32xf32> to vector<8x32xf32>
    %458 = vector.extract_strided_slice %5 {offsets = [24, 0], sizes = [8, 32], strides = [1, 1]} : vector<80x32xf32> to vector<8x32xf32>
    %459 = vector.extract_strided_slice %6 {offsets = [24, 0], sizes = [8, 32], strides = [1, 1]} : vector<80x32xf32> to vector<8x32xf32>
    %cst_67 = arith.constant dense<0.000000e+00> : vector<8x96xf32>
    %460 = tpu.matmul %427, %8, %cst_67 {dimension_numbers = #tpu.dot_dimension_numbers<[1], [0], [0], [1], [0, 0, 1, 1], [], []>} : vector<8x32xf32>, vector<32x96xf32>, vector<8x96xf32> -> vector<8x96xf32>
    %461 = vector.extract_strided_slice %460 {offsets = [0, 0], sizes = [8, 32], strides = [1, 1]} : vector<8x96xf32> to vector<8x32xf32>
    %462 = arith.addf %457, %461 : vector<8x32xf32>
    %463 = arith.negf %462 : vector<8x32xf32>
    %464 = math.exp %463 : vector<8x32xf32>
    %cst_68 = arith.constant 1.000000e+00 : f32
    %465 = vector.broadcast %cst_68 : f32 to vector<8x32xf32>
    %466 = arith.addf %465, %464 : vector<8x32xf32>
    %467 = arith.divf %465, %466 : vector<8x32xf32>
    %468 = vector.extract_strided_slice %460 {offsets = [0, 32], sizes = [8, 32], strides = [1, 1]} : vector<8x96xf32> to vector<8x32xf32>
    %469 = arith.addf %458, %468 : vector<8x32xf32>
    %470 = arith.negf %469 : vector<8x32xf32>
    %471 = math.exp %470 : vector<8x32xf32>
    %cst_69 = arith.constant 1.000000e+00 : f32
    %472 = vector.broadcast %cst_69 : f32 to vector<8x32xf32>
    %473 = arith.addf %472, %471 : vector<8x32xf32>
    %474 = arith.divf %472, %473 : vector<8x32xf32>
    %475 = vector.extract_strided_slice %460 {offsets = [0, 64], sizes = [8, 32], strides = [1, 1]} : vector<8x96xf32> to vector<8x32xf32>
    %476 = vector.broadcast %10 : vector<1x32xf32> to vector<8x32xf32>
    %477 = arith.addf %475, %476 : vector<8x32xf32>
    %478 = arith.mulf %467, %477 : vector<8x32xf32>
    %479 = arith.addf %459, %478 : vector<8x32xf32>
    %480 = math.tanh %479 : vector<8x32xf32>
    %cst_70 = arith.constant 1.000000e+00 : f32
    %481 = vector.broadcast %cst_70 : f32 to vector<8x32xf32>
    %482 = arith.subf %481, %474 : vector<8x32xf32>
    %483 = arith.mulf %482, %480 : vector<8x32xf32>
    %484 = arith.mulf %474, %427 : vector<8x32xf32>
    %485 = arith.addf %483, %484 : vector<8x32xf32>
    %486 = vector.extract_strided_slice %15 {offsets = [6, 0, 0], sizes = [1, 8, 1], strides = [1, 1, 1]} : vector<10x8x1xi1> to vector<1x8x1xi1>
    %487 = vector.shape_cast %486 : vector<1x8x1xi1> to vector<8x1xi1>
    %488 = vector.shape_cast %487 : vector<8x1xi1> to vector<8x1xi1>
    %489 = vector.broadcast %488 : vector<8x1xi1> to vector<8x32xi1>
    %490 = arith.select %489, %456, %422 : vector<8x32xi1>, vector<8x32xf32>
    %491 = vector.extract_strided_slice %15 {offsets = [3, 0, 0], sizes = [1, 8, 1], strides = [1, 1, 1]} : vector<10x8x1xi1> to vector<1x8x1xi1>
    %492 = vector.shape_cast %491 : vector<1x8x1xi1> to vector<8x1xi1>
    %493 = vector.shape_cast %492 : vector<8x1xi1> to vector<8x1xi1>
    %494 = vector.broadcast %493 : vector<8x1xi1> to vector<8x32xi1>
    %495 = arith.select %494, %485, %427 : vector<8x32xi1>, vector<8x32xf32>
    %496 = vector.extract_strided_slice %1 {offsets = [56, 0], sizes = [8, 32], strides = [1, 1]} : vector<80x32xf32> to vector<8x32xf32>
    %497 = vector.extract_strided_slice %2 {offsets = [56, 0], sizes = [8, 32], strides = [1, 1]} : vector<80x32xf32> to vector<8x32xf32>
    %498 = vector.extract_strided_slice %3 {offsets = [56, 0], sizes = [8, 32], strides = [1, 1]} : vector<80x32xf32> to vector<8x32xf32>
    %cst_71 = arith.constant dense<0.000000e+00> : vector<8x96xf32>
    %499 = tpu.matmul %490, %7, %cst_71 {dimension_numbers = #tpu.dot_dimension_numbers<[1], [0], [0], [1], [0, 0, 1, 1], [], []>} : vector<8x32xf32>, vector<32x96xf32>, vector<8x96xf32> -> vector<8x96xf32>
    %500 = vector.extract_strided_slice %499 {offsets = [0, 0], sizes = [8, 32], strides = [1, 1]} : vector<8x96xf32> to vector<8x32xf32>
    %501 = arith.addf %496, %500 : vector<8x32xf32>
    %502 = arith.negf %501 : vector<8x32xf32>
    %503 = math.exp %502 : vector<8x32xf32>
    %cst_72 = arith.constant 1.000000e+00 : f32
    %504 = vector.broadcast %cst_72 : f32 to vector<8x32xf32>
    %505 = arith.addf %504, %503 : vector<8x32xf32>
    %506 = arith.divf %504, %505 : vector<8x32xf32>
    %507 = vector.extract_strided_slice %499 {offsets = [0, 32], sizes = [8, 32], strides = [1, 1]} : vector<8x96xf32> to vector<8x32xf32>
    %508 = arith.addf %497, %507 : vector<8x32xf32>
    %509 = arith.negf %508 : vector<8x32xf32>
    %510 = math.exp %509 : vector<8x32xf32>
    %cst_73 = arith.constant 1.000000e+00 : f32
    %511 = vector.broadcast %cst_73 : f32 to vector<8x32xf32>
    %512 = arith.addf %511, %510 : vector<8x32xf32>
    %513 = arith.divf %511, %512 : vector<8x32xf32>
    %514 = vector.extract_strided_slice %499 {offsets = [0, 64], sizes = [8, 32], strides = [1, 1]} : vector<8x96xf32> to vector<8x32xf32>
    %515 = vector.broadcast %9 : vector<1x32xf32> to vector<8x32xf32>
    %516 = arith.addf %514, %515 : vector<8x32xf32>
    %517 = arith.mulf %506, %516 : vector<8x32xf32>
    %518 = arith.addf %498, %517 : vector<8x32xf32>
    %519 = math.tanh %518 : vector<8x32xf32>
    %cst_74 = arith.constant 1.000000e+00 : f32
    %520 = vector.broadcast %cst_74 : f32 to vector<8x32xf32>
    %521 = arith.subf %520, %513 : vector<8x32xf32>
    %522 = arith.mulf %521, %519 : vector<8x32xf32>
    %523 = arith.mulf %513, %490 : vector<8x32xf32>
    %524 = arith.addf %522, %523 : vector<8x32xf32>
    %525 = vector.extract_strided_slice %4 {offsets = [16, 0], sizes = [8, 32], strides = [1, 1]} : vector<80x32xf32> to vector<8x32xf32>
    %526 = vector.extract_strided_slice %5 {offsets = [16, 0], sizes = [8, 32], strides = [1, 1]} : vector<80x32xf32> to vector<8x32xf32>
    %527 = vector.extract_strided_slice %6 {offsets = [16, 0], sizes = [8, 32], strides = [1, 1]} : vector<80x32xf32> to vector<8x32xf32>
    %cst_75 = arith.constant dense<0.000000e+00> : vector<8x96xf32>
    %528 = tpu.matmul %495, %8, %cst_75 {dimension_numbers = #tpu.dot_dimension_numbers<[1], [0], [0], [1], [0, 0, 1, 1], [], []>} : vector<8x32xf32>, vector<32x96xf32>, vector<8x96xf32> -> vector<8x96xf32>
    %529 = vector.extract_strided_slice %528 {offsets = [0, 0], sizes = [8, 32], strides = [1, 1]} : vector<8x96xf32> to vector<8x32xf32>
    %530 = arith.addf %525, %529 : vector<8x32xf32>
    %531 = arith.negf %530 : vector<8x32xf32>
    %532 = math.exp %531 : vector<8x32xf32>
    %cst_76 = arith.constant 1.000000e+00 : f32
    %533 = vector.broadcast %cst_76 : f32 to vector<8x32xf32>
    %534 = arith.addf %533, %532 : vector<8x32xf32>
    %535 = arith.divf %533, %534 : vector<8x32xf32>
    %536 = vector.extract_strided_slice %528 {offsets = [0, 32], sizes = [8, 32], strides = [1, 1]} : vector<8x96xf32> to vector<8x32xf32>
    %537 = arith.addf %526, %536 : vector<8x32xf32>
    %538 = arith.negf %537 : vector<8x32xf32>
    %539 = math.exp %538 : vector<8x32xf32>
    %cst_77 = arith.constant 1.000000e+00 : f32
    %540 = vector.broadcast %cst_77 : f32 to vector<8x32xf32>
    %541 = arith.addf %540, %539 : vector<8x32xf32>
    %542 = arith.divf %540, %541 : vector<8x32xf32>
    %543 = vector.extract_strided_slice %528 {offsets = [0, 64], sizes = [8, 32], strides = [1, 1]} : vector<8x96xf32> to vector<8x32xf32>
    %544 = vector.broadcast %10 : vector<1x32xf32> to vector<8x32xf32>
    %545 = arith.addf %543, %544 : vector<8x32xf32>
    %546 = arith.mulf %535, %545 : vector<8x32xf32>
    %547 = arith.addf %527, %546 : vector<8x32xf32>
    %548 = math.tanh %547 : vector<8x32xf32>
    %cst_78 = arith.constant 1.000000e+00 : f32
    %549 = vector.broadcast %cst_78 : f32 to vector<8x32xf32>
    %550 = arith.subf %549, %542 : vector<8x32xf32>
    %551 = arith.mulf %550, %548 : vector<8x32xf32>
    %552 = arith.mulf %542, %495 : vector<8x32xf32>
    %553 = arith.addf %551, %552 : vector<8x32xf32>
    %554 = vector.extract_strided_slice %15 {offsets = [7, 0, 0], sizes = [1, 8, 1], strides = [1, 1, 1]} : vector<10x8x1xi1> to vector<1x8x1xi1>
    %555 = vector.shape_cast %554 : vector<1x8x1xi1> to vector<8x1xi1>
    %556 = vector.shape_cast %555 : vector<8x1xi1> to vector<8x1xi1>
    %557 = vector.broadcast %556 : vector<8x1xi1> to vector<8x32xi1>
    %558 = arith.select %557, %524, %490 : vector<8x32xi1>, vector<8x32xf32>
    %559 = vector.extract_strided_slice %15 {offsets = [2, 0, 0], sizes = [1, 8, 1], strides = [1, 1, 1]} : vector<10x8x1xi1> to vector<1x8x1xi1>
    %560 = vector.shape_cast %559 : vector<1x8x1xi1> to vector<8x1xi1>
    %561 = vector.shape_cast %560 : vector<8x1xi1> to vector<8x1xi1>
    %562 = vector.broadcast %561 : vector<8x1xi1> to vector<8x32xi1>
    %563 = arith.select %562, %553, %495 : vector<8x32xi1>, vector<8x32xf32>
    %564 = vector.extract_strided_slice %1 {offsets = [64, 0], sizes = [8, 32], strides = [1, 1]} : vector<80x32xf32> to vector<8x32xf32>
    %565 = vector.extract_strided_slice %2 {offsets = [64, 0], sizes = [8, 32], strides = [1, 1]} : vector<80x32xf32> to vector<8x32xf32>
    %566 = vector.extract_strided_slice %3 {offsets = [64, 0], sizes = [8, 32], strides = [1, 1]} : vector<80x32xf32> to vector<8x32xf32>
    %cst_79 = arith.constant dense<0.000000e+00> : vector<8x96xf32>
    %567 = tpu.matmul %558, %7, %cst_79 {dimension_numbers = #tpu.dot_dimension_numbers<[1], [0], [0], [1], [0, 0, 1, 1], [], []>} : vector<8x32xf32>, vector<32x96xf32>, vector<8x96xf32> -> vector<8x96xf32>
    %568 = vector.extract_strided_slice %567 {offsets = [0, 0], sizes = [8, 32], strides = [1, 1]} : vector<8x96xf32> to vector<8x32xf32>
    %569 = arith.addf %564, %568 : vector<8x32xf32>
    %570 = arith.negf %569 : vector<8x32xf32>
    %571 = math.exp %570 : vector<8x32xf32>
    %cst_80 = arith.constant 1.000000e+00 : f32
    %572 = vector.broadcast %cst_80 : f32 to vector<8x32xf32>
    %573 = arith.addf %572, %571 : vector<8x32xf32>
    %574 = arith.divf %572, %573 : vector<8x32xf32>
    %575 = vector.extract_strided_slice %567 {offsets = [0, 32], sizes = [8, 32], strides = [1, 1]} : vector<8x96xf32> to vector<8x32xf32>
    %576 = arith.addf %565, %575 : vector<8x32xf32>
    %577 = arith.negf %576 : vector<8x32xf32>
    %578 = math.exp %577 : vector<8x32xf32>
    %cst_81 = arith.constant 1.000000e+00 : f32
    %579 = vector.broadcast %cst_81 : f32 to vector<8x32xf32>
    %580 = arith.addf %579, %578 : vector<8x32xf32>
    %581 = arith.divf %579, %580 : vector<8x32xf32>
    %582 = vector.extract_strided_slice %567 {offsets = [0, 64], sizes = [8, 32], strides = [1, 1]} : vector<8x96xf32> to vector<8x32xf32>
    %583 = vector.broadcast %9 : vector<1x32xf32> to vector<8x32xf32>
    %584 = arith.addf %582, %583 : vector<8x32xf32>
    %585 = arith.mulf %574, %584 : vector<8x32xf32>
    %586 = arith.addf %566, %585 : vector<8x32xf32>
    %587 = math.tanh %586 : vector<8x32xf32>
    %cst_82 = arith.constant 1.000000e+00 : f32
    %588 = vector.broadcast %cst_82 : f32 to vector<8x32xf32>
    %589 = arith.subf %588, %581 : vector<8x32xf32>
    %590 = arith.mulf %589, %587 : vector<8x32xf32>
    %591 = arith.mulf %581, %558 : vector<8x32xf32>
    %592 = arith.addf %590, %591 : vector<8x32xf32>
    %593 = vector.extract_strided_slice %4 {offsets = [8, 0], sizes = [8, 32], strides = [1, 1]} : vector<80x32xf32> to vector<8x32xf32>
    %594 = vector.extract_strided_slice %5 {offsets = [8, 0], sizes = [8, 32], strides = [1, 1]} : vector<80x32xf32> to vector<8x32xf32>
    %595 = vector.extract_strided_slice %6 {offsets = [8, 0], sizes = [8, 32], strides = [1, 1]} : vector<80x32xf32> to vector<8x32xf32>
    %cst_83 = arith.constant dense<0.000000e+00> : vector<8x96xf32>
    %596 = tpu.matmul %563, %8, %cst_83 {dimension_numbers = #tpu.dot_dimension_numbers<[1], [0], [0], [1], [0, 0, 1, 1], [], []>} : vector<8x32xf32>, vector<32x96xf32>, vector<8x96xf32> -> vector<8x96xf32>
    %597 = vector.extract_strided_slice %596 {offsets = [0, 0], sizes = [8, 32], strides = [1, 1]} : vector<8x96xf32> to vector<8x32xf32>
    %598 = arith.addf %593, %597 : vector<8x32xf32>
    %599 = arith.negf %598 : vector<8x32xf32>
    %600 = math.exp %599 : vector<8x32xf32>
    %cst_84 = arith.constant 1.000000e+00 : f32
    %601 = vector.broadcast %cst_84 : f32 to vector<8x32xf32>
    %602 = arith.addf %601, %600 : vector<8x32xf32>
    %603 = arith.divf %601, %602 : vector<8x32xf32>
    %604 = vector.extract_strided_slice %596 {offsets = [0, 32], sizes = [8, 32], strides = [1, 1]} : vector<8x96xf32> to vector<8x32xf32>
    %605 = arith.addf %594, %604 : vector<8x32xf32>
    %606 = arith.negf %605 : vector<8x32xf32>
    %607 = math.exp %606 : vector<8x32xf32>
    %cst_85 = arith.constant 1.000000e+00 : f32
    %608 = vector.broadcast %cst_85 : f32 to vector<8x32xf32>
    %609 = arith.addf %608, %607 : vector<8x32xf32>
    %610 = arith.divf %608, %609 : vector<8x32xf32>
    %611 = vector.extract_strided_slice %596 {offsets = [0, 64], sizes = [8, 32], strides = [1, 1]} : vector<8x96xf32> to vector<8x32xf32>
    %612 = vector.broadcast %10 : vector<1x32xf32> to vector<8x32xf32>
    %613 = arith.addf %611, %612 : vector<8x32xf32>
    %614 = arith.mulf %603, %613 : vector<8x32xf32>
    %615 = arith.addf %595, %614 : vector<8x32xf32>
    %616 = math.tanh %615 : vector<8x32xf32>
    %cst_86 = arith.constant 1.000000e+00 : f32
    %617 = vector.broadcast %cst_86 : f32 to vector<8x32xf32>
    %618 = arith.subf %617, %610 : vector<8x32xf32>
    %619 = arith.mulf %618, %616 : vector<8x32xf32>
    %620 = arith.mulf %610, %563 : vector<8x32xf32>
    %621 = arith.addf %619, %620 : vector<8x32xf32>
    %622 = vector.extract_strided_slice %15 {offsets = [8, 0, 0], sizes = [1, 8, 1], strides = [1, 1, 1]} : vector<10x8x1xi1> to vector<1x8x1xi1>
    %623 = vector.shape_cast %622 : vector<1x8x1xi1> to vector<8x1xi1>
    %624 = vector.shape_cast %623 : vector<8x1xi1> to vector<8x1xi1>
    %625 = vector.broadcast %624 : vector<8x1xi1> to vector<8x32xi1>
    %626 = arith.select %625, %592, %558 : vector<8x32xi1>, vector<8x32xf32>
    %627 = vector.extract_strided_slice %15 {offsets = [1, 0, 0], sizes = [1, 8, 1], strides = [1, 1, 1]} : vector<10x8x1xi1> to vector<1x8x1xi1>
    %628 = vector.shape_cast %627 : vector<1x8x1xi1> to vector<8x1xi1>
    %629 = vector.shape_cast %628 : vector<8x1xi1> to vector<8x1xi1>
    %630 = vector.broadcast %629 : vector<8x1xi1> to vector<8x32xi1>
    %631 = arith.select %630, %621, %563 : vector<8x32xi1>, vector<8x32xf32>
    %632 = vector.extract_strided_slice %1 {offsets = [72, 0], sizes = [8, 32], strides = [1, 1]} : vector<80x32xf32> to vector<8x32xf32>
    %633 = vector.extract_strided_slice %2 {offsets = [72, 0], sizes = [8, 32], strides = [1, 1]} : vector<80x32xf32> to vector<8x32xf32>
    %634 = vector.extract_strided_slice %3 {offsets = [72, 0], sizes = [8, 32], strides = [1, 1]} : vector<80x32xf32> to vector<8x32xf32>
    %cst_87 = arith.constant dense<0.000000e+00> : vector<8x96xf32>
    %635 = tpu.matmul %626, %7, %cst_87 {dimension_numbers = #tpu.dot_dimension_numbers<[1], [0], [0], [1], [0, 0, 1, 1], [], []>} : vector<8x32xf32>, vector<32x96xf32>, vector<8x96xf32> -> vector<8x96xf32>
    %636 = vector.extract_strided_slice %635 {offsets = [0, 0], sizes = [8, 32], strides = [1, 1]} : vector<8x96xf32> to vector<8x32xf32>
    %637 = arith.addf %632, %636 : vector<8x32xf32>
    %638 = arith.negf %637 : vector<8x32xf32>
    %639 = math.exp %638 : vector<8x32xf32>
    %cst_88 = arith.constant 1.000000e+00 : f32
    %640 = vector.broadcast %cst_88 : f32 to vector<8x32xf32>
    %641 = arith.addf %640, %639 : vector<8x32xf32>
    %642 = arith.divf %640, %641 : vector<8x32xf32>
    %643 = vector.extract_strided_slice %635 {offsets = [0, 32], sizes = [8, 32], strides = [1, 1]} : vector<8x96xf32> to vector<8x32xf32>
    %644 = arith.addf %633, %643 : vector<8x32xf32>
    %645 = arith.negf %644 : vector<8x32xf32>
    %646 = math.exp %645 : vector<8x32xf32>
    %cst_89 = arith.constant 1.000000e+00 : f32
    %647 = vector.broadcast %cst_89 : f32 to vector<8x32xf32>
    %648 = arith.addf %647, %646 : vector<8x32xf32>
    %649 = arith.divf %647, %648 : vector<8x32xf32>
    %650 = vector.extract_strided_slice %635 {offsets = [0, 64], sizes = [8, 32], strides = [1, 1]} : vector<8x96xf32> to vector<8x32xf32>
    %651 = vector.broadcast %9 : vector<1x32xf32> to vector<8x32xf32>
    %652 = arith.addf %650, %651 : vector<8x32xf32>
    %653 = arith.mulf %642, %652 : vector<8x32xf32>
    %654 = arith.addf %634, %653 : vector<8x32xf32>
    %655 = math.tanh %654 : vector<8x32xf32>
    %cst_90 = arith.constant 1.000000e+00 : f32
    %656 = vector.broadcast %cst_90 : f32 to vector<8x32xf32>
    %657 = arith.subf %656, %649 : vector<8x32xf32>
    %658 = arith.mulf %657, %655 : vector<8x32xf32>
    %659 = arith.mulf %649, %626 : vector<8x32xf32>
    %660 = arith.addf %658, %659 : vector<8x32xf32>
    %661 = vector.extract_strided_slice %4 {offsets = [0, 0], sizes = [8, 32], strides = [1, 1]} : vector<80x32xf32> to vector<8x32xf32>
    %662 = vector.extract_strided_slice %5 {offsets = [0, 0], sizes = [8, 32], strides = [1, 1]} : vector<80x32xf32> to vector<8x32xf32>
    %663 = vector.extract_strided_slice %6 {offsets = [0, 0], sizes = [8, 32], strides = [1, 1]} : vector<80x32xf32> to vector<8x32xf32>
    %cst_91 = arith.constant dense<0.000000e+00> : vector<8x96xf32>
    %664 = tpu.matmul %631, %8, %cst_91 {dimension_numbers = #tpu.dot_dimension_numbers<[1], [0], [0], [1], [0, 0, 1, 1], [], []>} : vector<8x32xf32>, vector<32x96xf32>, vector<8x96xf32> -> vector<8x96xf32>
    %665 = vector.extract_strided_slice %664 {offsets = [0, 0], sizes = [8, 32], strides = [1, 1]} : vector<8x96xf32> to vector<8x32xf32>
    %666 = arith.addf %661, %665 : vector<8x32xf32>
    %667 = arith.negf %666 : vector<8x32xf32>
    %668 = math.exp %667 : vector<8x32xf32>
    %cst_92 = arith.constant 1.000000e+00 : f32
    %669 = vector.broadcast %cst_92 : f32 to vector<8x32xf32>
    %670 = arith.addf %669, %668 : vector<8x32xf32>
    %671 = arith.divf %669, %670 : vector<8x32xf32>
    %672 = vector.extract_strided_slice %664 {offsets = [0, 32], sizes = [8, 32], strides = [1, 1]} : vector<8x96xf32> to vector<8x32xf32>
    %673 = arith.addf %662, %672 : vector<8x32xf32>
    %674 = arith.negf %673 : vector<8x32xf32>
    %675 = math.exp %674 : vector<8x32xf32>
    %cst_93 = arith.constant 1.000000e+00 : f32
    %676 = vector.broadcast %cst_93 : f32 to vector<8x32xf32>
    %677 = arith.addf %676, %675 : vector<8x32xf32>
    %678 = arith.divf %676, %677 : vector<8x32xf32>
    %679 = vector.extract_strided_slice %664 {offsets = [0, 64], sizes = [8, 32], strides = [1, 1]} : vector<8x96xf32> to vector<8x32xf32>
    %680 = vector.broadcast %10 : vector<1x32xf32> to vector<8x32xf32>
    %681 = arith.addf %679, %680 : vector<8x32xf32>
    %682 = arith.mulf %671, %681 : vector<8x32xf32>
    %683 = arith.addf %663, %682 : vector<8x32xf32>
    %684 = math.tanh %683 : vector<8x32xf32>
    %cst_94 = arith.constant 1.000000e+00 : f32
    %685 = vector.broadcast %cst_94 : f32 to vector<8x32xf32>
    %686 = arith.subf %685, %678 : vector<8x32xf32>
    %687 = arith.mulf %686, %684 : vector<8x32xf32>
    %688 = arith.mulf %678, %631 : vector<8x32xf32>
    %689 = arith.addf %687, %688 : vector<8x32xf32>
    %690 = vector.extract_strided_slice %15 {offsets = [9, 0, 0], sizes = [1, 8, 1], strides = [1, 1, 1]} : vector<10x8x1xi1> to vector<1x8x1xi1>
    %691 = vector.shape_cast %690 : vector<1x8x1xi1> to vector<8x1xi1>
    %692 = vector.shape_cast %691 : vector<8x1xi1> to vector<8x1xi1>
    %693 = vector.broadcast %692 : vector<8x1xi1> to vector<8x32xi1>
    %694 = arith.select %693, %660, %626 : vector<8x32xi1>, vector<8x32xf32>
    %695 = vector.extract_strided_slice %15 {offsets = [0, 0, 0], sizes = [1, 8, 1], strides = [1, 1, 1]} : vector<10x8x1xi1> to vector<1x8x1xi1>
    %696 = vector.shape_cast %695 : vector<1x8x1xi1> to vector<8x1xi1>
    %697 = vector.shape_cast %696 : vector<8x1xi1> to vector<8x1xi1>
    %698 = vector.broadcast %697 : vector<8x1xi1> to vector<8x32xi1>
    %699 = arith.select %698, %689, %631 : vector<8x32xi1>, vector<8x32xf32>
    %c0_95 = arith.constant 0 : index
    %c0_96 = arith.constant 0 : index
    %700 = vector.load %arg12[%c0_95, %c0_96] : memref<8x64xf32, #tpu.memory_space<vmem>>, vector<8x32xf32>
    tpu.vector_store %arg12[%c0_95, %c0_96], %694 {strides = array<i32>} : memref<8x64xf32, #tpu.memory_space<vmem>>, vector<8x32xf32>,
    %c0_97 = arith.constant 0 : index
    %c32 = arith.constant 32 : index
    %701 = vector.load %arg12[%c0_97, %c32] : memref<8x64xf32, #tpu.memory_space<vmem>>, vector<8x32xf32>
    tpu.vector_store %arg12[%c0_97, %c32], %699 {strides = array<i32>} : memref<8x64xf32, #tpu.memory_space<vmem>>, vector<8x32xf32>,
    %c0_98 = arith.constant 0 : index
    %c0_99 = arith.constant 0 : index
    %702 = vector.load %arg7[%c0_98, %c0_99] : memref<32x100xf32, #tpu.memory_space<vmem>>, vector<32x100xf32>
    %cst_100 = arith.constant dense<0.000000e+00> : vector<8x100xf32>
    %703 = tpu.matmul %694, %702, %cst_100 {dimension_numbers = #tpu.dot_dimension_numbers<[1], [0], [0], [1], [0, 0, 1, 1], [], []>} : vector<8x32xf32>, vector<32x100xf32>, vector<8x100xf32> -> vector<8x100xf32>
    %c0_101 = arith.constant 0 : index
    %c0_102 = arith.constant 0 : index
    %704 = vector.load %arg8[%c0_101, %c0_102] : memref<32x100xf32, #tpu.memory_space<vmem>>, vector<32x100xf32>
    %cst_103 = arith.constant dense<0.000000e+00> : vector<8x100xf32>
    %705 = tpu.matmul %699, %704, %cst_103 {dimension_numbers = #tpu.dot_dimension_numbers<[1], [0], [0], [1], [0, 0, 1, 1], [], []>} : vector<8x32xf32>, vector<32x100xf32>, vector<8x100xf32> -> vector<8x100xf32>
    %706 = arith.addf %703, %705 : vector<8x100xf32>
    %c0_104 = arith.constant 0 : index
    %c0_105 = arith.constant 0 : index
    %707 = vector.load %arg9[%c0_104, %c0_105] : memref<1x100xf32, #tpu.memory_space<vmem>>, vector<1x100xf32>
    %708 = vector.broadcast %707 : vector<1x100xf32> to vector<8x100xf32>
    %709 = arith.addf %706, %708 : vector<8x100xf32>
    %cst_106 = arith.constant 0.000000e+00 : f32
    %710 = vector.broadcast %cst_106 : f32 to vector<8x100xf32>
    %711 = arith.maximumf %709, %710 : vector<8x100xf32>
    %c0_107 = arith.constant 0 : index
    %c0_108 = arith.constant 0 : index
    %712 = vector.load %arg10[%c0_107, %c0_108] : memref<100x3xf32, #tpu.memory_space<vmem>>, vector<100x3xf32>
    %cst_109 = arith.constant dense<0.000000e+00> : vector<8x3xf32>
    %713 = tpu.matmul %711, %712, %cst_109 {dimension_numbers = #tpu.dot_dimension_numbers<[1], [0], [0], [1], [0, 0, 1, 1], [], []>} : vector<8x100xf32>, vector<100x3xf32>, vector<8x3xf32> -> vector<8x3xf32>
    %c0_110 = arith.constant 0 : index
    %c0_111 = arith.constant 0 : index
    %714 = vector.load %arg11[%c0_110, %c0_111] : memref<1x3xf32, #tpu.memory_space<vmem>>, vector<1x3xf32>
    %715 = vector.broadcast %714 : vector<1x3xf32> to vector<8x3xf32>
    %716 = arith.addf %713, %715 : vector<8x3xf32>
    %c0_112 = arith.constant 0 : index
    %c0_113 = arith.constant 0 : index
    %717 = vector.load %arg13[%c0_112, %c0_113] : memref<8x3xf32, #tpu.memory_space<vmem>>, vector<8x3xf32>
    tpu.vector_store %arg13[%c0_112, %c0_113], %716 {strides = array<i32>} : memref<8x3xf32, #tpu.memory_space<vmem>>, vector<8x3xf32>,
    return
  }
}

</mosaic_0001>

<llo_original>
// kernel: two_sentence_forward.1
$region0: #{two_sentence_forward.1}
  #allocation0 [shape = 'u32[]', space=smem, size = 0x4, offset = 0x4, fixed_abs, tag = 'smem constant byte address 0x4 - core index']
  #allocation1 [shape = 'u32[72,128]{1,0:T(1,128)}', space=vmem, size = 0x9000, scoped, tag = 'internal scratch']
  %s0 = inlined_call_operand.vmem [shape: f32[80,192], index: 0, kind: input, shape index: {}]
  %s1 = inlined_call_operand.vmem [shape: s32[8,1], index: 1, kind: input, shape index: {}]
  %s2 = inlined_call_operand.vmem [shape: f32[2,8,32], index: 2, kind: input, shape index: {}]
  %s3 = inlined_call_operand.vmem [shape: f32[32,96], index: 3, kind: input, shape index: {}]
  %s4 = inlined_call_operand.vmem [shape: f32[32,96], index: 4, kind: input, shape index: {}]
  %s5 = inlined_call_operand.vmem [shape: f32[1,32], index: 5, kind: input, shape index: {}]
  %s6 = inlined_call_operand.vmem [shape: f32[1,32], index: 6, kind: input, shape index: {}]
  %s7 = inlined_call_operand.vmem [shape: f32[32,100], index: 7, kind: input, shape index: {}]
  %s8 = inlined_call_operand.vmem [shape: f32[32,100], index: 8, kind: input, shape index: {}]
  %s9 = inlined_call_operand.vmem [shape: f32[1,100], index: 9, kind: input, shape index: {}]
  %s10 = inlined_call_operand.vmem [shape: f32[100,3], index: 10, kind: input, shape index: {}]
  %s11 = inlined_call_operand.vmem [shape: f32[1,3], index: 11, kind: input, shape index: {}]
  %s12 = inlined_call_operand.vmem [shape: f32[8,64], index: 12, kind: output, shape index: {0}]
  %s13 = inlined_call_operand.vmem [shape: f32[8,3], index: 13, kind: output, shape index: {1}]
  %14 = xla_tuple %s12, %s13
  %s15 = sld [smem:[#allocation0]]
  $region66: #{two_sentence_forward.1} parent=0
    _
  %s17 = ssub.s32 1, %s15
  %s18 = scalar_select 0, %s17, %s15
  // Predicated region
  $region2: #{two_sentence_forward.1} parent=0 // pred_check
    _
  $region3: #{two_sentence_forward.1} parent=0 // pred_check_branch
    %20 = sbr.rel (0) target = $region5
  $region4: #{two_sentence_forward.1} parent=0 // pred_region
    _
  $region5: #{two_sentence_forward.1} parent=0 // pred_fallthru
    _
  // Predicated region
  $region6: #{two_sentence_forward.1} parent=0 // pred_check
    _
  $region7: #{two_sentence_forward.1} parent=0 // pred_check_branch
    %22 = sbr.rel (0) target = $region9
  $region8: #{two_sentence_forward.1} parent=0 // pred_region
    _
  $region9: #{two_sentence_forward.1} parent=0 // pred_fallthru
    _
  // Predicated region
  $region10: #{two_sentence_forward.1} parent=0 // pred_check
    _
  $region11: #{two_sentence_forward.1} parent=0 // pred_check_branch
    %24 = sbr.rel (0) target = $region13
  $region12: #{two_sentence_forward.1} parent=0 // pred_region
    _
  $region13: #{two_sentence_forward.1} parent=0 // pred_fallthru
    _
  // Predicated region
  $region14: #{two_sentence_forward.1} parent=0 // pred_check
    _
  $region15: #{two_sentence_forward.1} parent=0 // pred_check_branch
    %26 = sbr.rel (0) target = $region17
  $region16: #{two_sentence_forward.1} parent=0 // pred_region
    _
  $region17: #{two_sentence_forward.1} parent=0 // pred_fallthru
    _
  // Predicated region
  $region18: #{two_sentence_forward.1} parent=0 // pred_check
    _
  $region19: #{two_sentence_forward.1} parent=0 // pred_check_branch
    %28 = sbr.rel (0) target = $region21
  $region20: #{two_sentence_forward.1} parent=0 // pred_region
    _
  $region21: #{two_sentence_forward.1} parent=0 // pred_fallthru
    _
  // Predicated region
  $region22: #{two_sentence_forward.1} parent=0 // pred_check
    _
  $region23: #{two_sentence_forward.1} parent=0 // pred_check_branch
    %30 = sbr.rel (0) target = $region25
  $region24: #{two_sentence_forward.1} parent=0 // pred_region
    _
  $region25: #{two_sentence_forward.1} parent=0 // pred_fallthru
    _
  // Predicated region
  $region26: #{two_sentence_forward.1} parent=0 // pred_check
    _
  $region27: #{two_sentence_forward.1} parent=0 // pred_check_branch
    %32 = sbr.rel (0) target = $region29
  $region28: #{two_sentence_forward.1} parent=0 // pred_region
    _
  $region29: #{two_sentence_forward.1} parent=0 // pred_fallthru
    _
  // Predicated region
  $region30: #{two_sentence_forward.1} parent=0 // pred_check
    _
  $region31: #{two_sentence_forward.1} parent=0 // pred_check_branch
    %34 = sbr.rel (0) target = $region33
  $region32: #{two_sentence_forward.1} parent=0 // pred_region
    _
  $region33: #{two_sentence_forward.1} parent=0 // pred_fallthru
    _
  // Predicated region
  $region34: #{two_sentence_forward.1} parent=0 // pred_check
    _
  $region35: #{two_sentence_forward.1} parent=0 // pred_check_branch
    %36 = sbr.rel (0) target = $region37
  $region36: #{two_sentence_forward.1} parent=0 // pred_region
    _
  $region37: #{two_sentence_forward.1} parent=0 // pred_fallthru
    _
  // Predicated region
  $region38: #{two_sentence_forward.1} parent=0 // pred_check
    _
  $region39: #{two_sentence_forward.1} parent=0 // pred_check_branch
    %38 = sbr.rel (0) target = $region41
  $region40: #{two_sentence_forward.1} parent=0 // pred_region
    _
  $region41: #{two_sentence_forward.1} parent=0 // pred_fallthru
    _
  // Predicated region
  $region42: #{two_sentence_forward.1} parent=0 // pred_check
    _
  $region43: #{two_sentence_forward.1} parent=0 // pred_check_branch
    %40 = sbr.rel (0) target = $region45
  $region44: #{two_sentence_forward.1} parent=0 // pred_region
    _
  $region45: #{two_sentence_forward.1} parent=0 // pred_fallthru
    _
  // Predicated region
  $region46: #{two_sentence_forward.1} parent=0 // pred_check
    _
  $region47: #{two_sentence_forward.1} parent=0 // pred_check_branch
    %42 = sbr.rel (0) target = $region49
  $region48: #{two_sentence_forward.1} parent=0 // pred_region
    _
  $region49: #{two_sentence_forward.1} parent=0 // pred_fallthru
    _
  %v43 = vld [vmem:[%s0] sm:$0xff]
  %v44 = vld [vmem:[%s0 + $0x8] sm:$0xff]
  %v45 = vld [vmem:[%s0 + $0x10] sm:$0xff]
  %v46 = vld [vmem:[%s0 + $0x18] sm:$0xff]
  %v47 = vld [vmem:[%s0 + $0x20] sm:$0xff]
  %v48 = vld [vmem:[%s0 + $0x28] sm:$0xff]
  %v49 = vld [vmem:[%s0 + $0x30] sm:$0xff]
  %v50 = vld [vmem:[%s0 + $0x38] sm:$0xff]
  %v51 = vld [vmem:[%s0 + $0x40] sm:$0xff]
  %v52 = vld [vmem:[%s0 + $0x48] sm:$0xff]
  %v53 = vld [vmem:[%s0 + $0x50] sm:$0xff]
  %v54 = vld [vmem:[%s0 + $0x58] sm:$0xff]
  %v55 = vld [vmem:[%s0 + $0x60] sm:$0xff]
  %v56 = vld [vmem:[%s0 + $0x68] sm:$0xff]
  %v57 = vld [vmem:[%s0 + $0x70] sm:$0xff]
  %v58 = vld [vmem:[%s0 + $0x78] sm:$0xff]
  %v59 = vld [vmem:[%s0 + $0x80] sm:$0xff]
  %v60 = vld [vmem:[%s0 + $0x88] sm:$0xff]
  %v61 = vld [vmem:[%s0 + $0x90] sm:$0xff]
  %v62 = vld [vmem:[%s0 + $0x98] sm:$0xff]
  %v63 = vld [vmem:[%s3] sm:$0xff]
  %v64 = vld [vmem:[%s3 + $0x8] sm:$0xff]
  %v65 = vld [vmem:[%s3 + $0x10] sm:$0xff]
  %v66 = vld [vmem:[%s3 + $0x18] sm:$0xff]
  %v67 = vld [vmem:[%s4] sm:$0xff]
  %v68 = vld [vmem:[%s4 + $0x8] sm:$0xff]
  %v69 = vld [vmem:[%s4 + $0x10] sm:$0xff]
  %v70 = vld [vmem:[%s4 + $0x18] sm:$0xff]
  %v71 = vld [vmem:[%s5] sm:$0x1]
  %v72 = vld [vmem:[%s6] sm:$0x1]
  %v73 = vld [vmem:[%s1] sm:$0xff]
  %vm74 = vcmp.gt.s32.totalorder %v73, 0
  %vm75 = vcmp.gt.s32.totalorder %v73, 1
  %vm76 = vcmp.gt.s32.totalorder %v73, 2
  %vm77 = vcmp.gt.s32.totalorder %v73, 3
  %vm78 = vcmp.gt.s32.totalorder %v73, 4
  %vm79 = vcmp.gt.s32.totalorder %v73, 5
  %vm80 = vcmp.gt.s32.totalorder %v73, 6
  %vm81 = vcmp.gt.s32.totalorder %v73, 7
  %vm82 = vcmp.gt.s32.totalorder %v73, 8
  %vm83 = vcmp.gt.s32.totalorder %v73, 9
  %v84 = vld [vmem:[%s2] sm:$0xff]
  %s85 = scalar_lea.vmem %s2, 8
  %v86 = vld [vmem:[%s85] sm:$0xff]
  %vm87 = vcmask 261120
  %v89 = vsel %vm87, %v84, 0
  %91 = vmatpush.msra.mxu0 0.0
  %92 = vmatpush.msra.mxu0 0.0
  %93 = vmatpush.msra.mxu0 0.0
  %94 = vmatpush.msra.mxu0 0.0
  %95 = vmatpush.msra.mxu0 0.0
  %96 = vmatpush.msra.mxu0 0.0
  %97 = vmatpush.msra.mxu0 0.0
  %98 = vmatpush.msra.mxu0 0.0
  %99 = vmatpush.msra.mxu0 0.0
  %100 = vmatpush.msra.mxu0 0.0
  %101 = vmatpush.msra.mxu0 0.0
  %102 = vmatpush.msra.mxu0 0.0
  %103 = vmatpush.msra.mxu0 %v66
  %104 = vmatpush.msra.mxu0 %v65
  %105 = vmatpush.msra.mxu0 %v64
  %106 = vmatpush.msra.mxu0 %v63
  %107 = vmatmul.f32.gmra.mxu0 %v89
  %v108 = vpop.f32.mrf.mxu0
  %v109 = vadd.f32 0.0, %v108
  %110 = vdwg.mxu0
  %v111 = vadd.f32 %v43, %v109
  %v112 = vxor.u32 %v111, 2147483648
  %v113 = vmul.f32 %v112, 1.442695
  %v114 = vpow.pop %v113
  %v115 = vadd.f32 %v114, 1.0
  %v116 = vrcp.pop %v115
  %v117 = vmul.f32 %v115, %v116
  %v118 = vsub.f32 1.0, %v117
  %v119 = vmul.f32 %v116, %v118
  %v120 = vadd.f32 %v116, %v119
  %vm121 = vweird.f32 %v115
  %vm122 = vweird.f32 %v116
  %vm123 = vmor %vm121, %vm122
  %v124 = vsel %vm123, %v116, %v120
  %v125 = vand.u32 2147483647, %v115
  %vm126 = vcmp.eq.f32.partialorder %v125, 8.507059e+37
  %v127 = vand.u32 %v115, 2147483648
  %v128 = vor.u32 1.1754944e-38, %v127
  %v129 = vsel %vm126, %v128, %v124
  %v130 = vmul.f32 1.0, %v129
  %v132 = vperm.slane %v71, 0
  %133 = vrot.lane.b32.xlu0 %v132, 64
  %v134 = vpop.permute.xlu0 %133
  %v136 = vadd.f32 %v109, %v134
  %138 = vrot.lane.b32.xlu0 %v136, 64
  %v139 = vpop.permute.xlu0 %138
  %v141 = vmul.f32 %v130, %v139
  %143 = vrot.lane.b32.xlu0 %v141, 64
  %v144 = vpop.permute.xlu0 %143
  %v146 = vadd.f32 %v43, %v144
  %v147 = vtanh.pop %v146
  %v148 = vsub.f32 1.0, %v130
  %150 = vrot.lane.b32.xlu0 %v147, 96
  %v151 = vpop.permute.xlu0 %150
  %v153 = vmul.f32 %v148, %v151
  %154 = vrot.lane.b32.xlu0 %v84, 32
  %v155 = vpop.permute.xlu0 %154
  %v157 = vmul.f32 %v130, %v155
  %v158 = vadd.f32 %v153, %v157
  %v160 = vsel %vm87, %v86, 0
  %162 = vmatpush.msra.mxu0 0.0
  %163 = vmatpush.msra.mxu0 0.0
  %164 = vmatpush.msra.mxu0 0.0
  %165 = vmatpush.msra.mxu0 0.0
  %166 = vmatpush.msra.mxu0 0.0
  %167 = vmatpush.msra.mxu0 0.0
  %168 = vmatpush.msra.mxu0 0.0
  %169 = vmatpush.msra.mxu0 0.0
  %170 = vmatpush.msra.mxu0 0.0
  %171 = vmatpush.msra.mxu0 0.0
  %172 = vmatpush.msra.mxu0 0.0
  %173 = vmatpush.msra.mxu0 0.0
  %174 = vmatpush.msra.mxu0 %v70
  %175 = vmatpush.msra.mxu0 %v69
  %176 = vmatpush.msra.mxu0 %v68
  %177 = vmatpush.msra.mxu0 %v67
  %178 = vmatmul.f32.gmra.mxu0 %v160
  %v179 = vpop.f32.mrf.mxu0
  %v180 = vadd.f32 0.0, %v179
  %181 = vdwg.mxu0
  %183 = vrot.lane.b32.xlu0 %v180, 96
  %v184 = vpop.permute.xlu0 %183
  %v186 = vadd.f32 %v61, %v184
  %v187 = vxor.u32 %v186, 2147483648
  %v188 = vmul.f32 %v187, 1.442695
  %v189 = vpow.pop %v188
  %v190 = vadd.f32 %v189, 1.0
  %v191 = vrcp.pop %v190
  %v192 = vmul.f32 %v190, %v191
  %v193 = vsub.f32 1.0, %v192
  %v194 = vmul.f32 %v191, %v193
  %v195 = vadd.f32 %v191, %v194
  %vm196 = vweird.f32 %v190
  %vm197 = vweird.f32 %v191
  %vm198 = vmor %vm196, %vm197
  %v199 = vsel %vm198, %v191, %v195
  %v200 = vand.u32 2147483647, %v190
  %vm201 = vcmp.eq.f32.partialorder %v200, 8.507059e+37
  %v202 = vand.u32 %v190, 2147483648
  %v203 = vor.u32 1.1754944e-38, %v202
  %v204 = vsel %vm201, %v203, %v199
  %v205 = vmul.f32 1.0, %v204
  %v206 = vadd.f32 %v62, %v184
  %v207 = vxor.u32 %v206, 2147483648
  %v208 = vmul.f32 %v207, 1.442695
  %v209 = vpow.pop %v208
  %v210 = vadd.f32 %v209, 1.0
  %v211 = vrcp.pop %v210
  %v212 = vmul.f32 %v210, %v211
  %v213 = vsub.f32 1.0, %v212
  %v214 = vmul.f32 %v211, %v213
  %v215 = vadd.f32 %v211, %v214
  %vm216 = vweird.f32 %v210
  %vm217 = vweird.f32 %v211
  %vm218 = vmor %vm216, %vm217
  %v219 = vsel %vm218, %v211, %v215
  %v220 = vand.u32 2147483647, %v210
  %vm221 = vcmp.eq.f32.partialorder %v220, 8.507059e+37
  %v222 = vand.u32 %v210, 2147483648
  %v223 = vor.u32 1.1754944e-38, %v222
  %v224 = vsel %vm221, %v223, %v219
  %v225 = vmul.f32 1.0, %v224
  %v227 = vperm.slane %v72, 0
  %228 = vrot.lane.b32.xlu0 %v227, 64
  %v229 = vpop.permute.xlu0 %228
  %v231 = vadd.f32 %v180, %v229
  %233 = vrot.lane.b32.xlu0 %v231, 32
  %v234 = vpop.permute.xlu0 %233
  %v236 = vmul.f32 %v205, %v234
  %238 = vrot.lane.b32.xlu0 %v236, 64
  %v239 = vpop.permute.xlu0 %238
  %v241 = vadd.f32 %v62, %v239
  %v242 = vtanh.pop %v241
  %v243 = vsub.f32 1.0, %v225
  %245 = vrot.lane.b32.xlu0 %v242, 96
  %v246 = vpop.permute.xlu0 %245
  %v248 = vmul.f32 %v243, %v246
  %v249 = vmul.f32 %v225, %v86
  %v250 = vadd.f32 %v248, %v249
  %v251 = vsel %vm74, 1, 0
  %252 = vset.pattern.permute.xlu0 0
  %253 = vperm.xlu0 %252, %v251
  %v254 = vpop.permute.xlu0 %253
  %vm255 = vcmp.eq.s32.totalorder %v254, 1
  %v256 = vsel %vm255, %v158, %v155
  %v257 = vsel %vm83, 1, 0
  %258 = vset.pattern.permute.xlu0 0
  %259 = vperm.xlu0 %258, %v257
  %v260 = vpop.permute.xlu0 %259
  %vm261 = vcmp.eq.s32.totalorder %v260, 1
  %v262 = vsel %vm261, %v250, %v86
  %264 = vrot.lane.b32.xlu0 %v256, 96
  %v265 = vpop.permute.xlu0 %264
  %v266 = vsel %vm87, %v265, 0
  %268 = vmatpush.msra.mxu0 0.0
  %269 = vmatpush.msra.mxu0 0.0
  %270 = vmatpush.msra.mxu0 0.0
  %271 = vmatpush.msra.mxu0 0.0
  %272 = vmatpush.msra.mxu0 0.0
  %273 = vmatpush.msra.mxu0 0.0
  %274 = vmatpush.msra.mxu0 0.0
  %275 = vmatpush.msra.mxu0 0.0
  %276 = vmatpush.msra.mxu0 0.0
  %277 = vmatpush.msra.mxu0 0.0
  %278 = vmatpush.msra.mxu0 0.0
  %279 = vmatpush.msra.mxu0 0.0
  %280 = vmatpush.msra.mxu0 %v66
  %281 = vmatpush.msra.mxu0 %v65
  %282 = vmatpush.msra.mxu0 %v64
  %283 = vmatpush.msra.mxu0 %v63
  %284 = vmatmul.f32.gmra.mxu0 %v266
  %v285 = vpop.f32.mrf.mxu0
  %v286 = vadd.f32 0.0, %v285
  %287 = vdwg.mxu0
  %v288 = vadd.f32 %v45, %v286
  %v289 = vxor.u32 %v288, 2147483648
  %v290 = vmul.f32 %v289, 1.442695
  %v291 = vpow.pop %v290
  %v292 = vadd.f32 %v291, 1.0
  %v293 = vrcp.pop %v292
  %v294 = vmul.f32 %v292, %v293
  %v295 = vsub.f32 1.0, %v294
  %v296 = vmul.f32 %v293, %v295
  %v297 = vadd.f32 %v293, %v296
  %vm298 = vweird.f32 %v292
  %vm299 = vweird.f32 %v293
  %vm300 = vmor %vm298, %vm299
  %v301 = vsel %vm300, %v293, %v297
  %v302 = vand.u32 2147483647, %v292
  %vm303 = vcmp.eq.f32.partialorder %v302, 8.507059e+37
  %v304 = vand.u32 %v292, 2147483648
  %v305 = vor.u32 1.1754944e-38, %v304
  %v306 = vsel %vm303, %v305, %v301
  %v307 = vmul.f32 1.0, %v306
  %v308 = vadd.f32 %v286, %v134
  %310 = vrot.lane.b32.xlu0 %v308, 64
  %v311 = vpop.permute.xlu0 %310
  %v313 = vmul.f32 %v307, %v311
  %315 = vrot.lane.b32.xlu0 %v313, 64
  %v316 = vpop.permute.xlu0 %315
  %v318 = vadd.f32 %v45, %v316
  %v319 = vtanh.pop %v318
  %v320 = vsub.f32 1.0, %v307
  %322 = vrot.lane.b32.xlu0 %v319, 96
  %v323 = vpop.permute.xlu0 %322
  %v325 = vmul.f32 %v320, %v323
  %v326 = vmul.f32 %v307, %v256
  %v327 = vadd.f32 %v325, %v326
  %v329 = vsel %vm87, %v262, 0
  %331 = vmatpush.msra.mxu0 0.0
  %332 = vmatpush.msra.mxu0 0.0
  %333 = vmatpush.msra.mxu0 0.0
  %334 = vmatpush.msra.mxu0 0.0
  %335 = vmatpush.msra.mxu0 0.0
  %336 = vmatpush.msra.mxu0 0.0
  %337 = vmatpush.msra.mxu0 0.0
  %338 = vmatpush.msra.mxu0 0.0
  %339 = vmatpush.msra.mxu0 0.0
  %340 = vmatpush.msra.mxu0 0.0
  %341 = vmatpush.msra.mxu0 0.0
  %342 = vmatpush.msra.mxu0 0.0
  %343 = vmatpush.msra.mxu0 %v70
  %344 = vmatpush.msra.mxu0 %v69
  %345 = vmatpush.msra.mxu0 %v68
  %346 = vmatpush.msra.mxu0 %v67
  %347 = vmatmul.f32.gmra.mxu0 %v329
  %v348 = vpop.f32.mrf.mxu0
  %v349 = vadd.f32 0.0, %v348
  %350 = vdwg.mxu0
  %352 = vrot.lane.b32.xlu0 %v349, 96
  %v353 = vpop.permute.xlu0 %352
  %v355 = vadd.f32 %v59, %v353
  %v356 = vxor.u32 %v355, 2147483648
  %v357 = vmul.f32 %v356, 1.442695
  %v358 = vpow.pop %v357
  %v359 = vadd.f32 %v358, 1.0
  %v360 = vrcp.pop %v359
  %v361 = vmul.f32 %v359, %v360
  %v362 = vsub.f32 1.0, %v361
  %v363 = vmul.f32 %v360, %v362
  %v364 = vadd.f32 %v360, %v363
  %vm365 = vweird.f32 %v359
  %vm366 = vweird.f32 %v360
  %vm367 = vmor %vm365, %vm366
  %v368 = vsel %vm367, %v360, %v364
  %v369 = vand.u32 2147483647, %v359
  %vm370 = vcmp.eq.f32.partialorder %v369, 8.507059e+37
  %v371 = vand.u32 %v359, 2147483648
  %v372 = vor.u32 1.1754944e-38, %v371
  %v373 = vsel %vm370, %v372, %v368
  %v374 = vmul.f32 1.0, %v373
  %v375 = vadd.f32 %v60, %v353
  %v376 = vxor.u32 %v375, 2147483648
  %v377 = vmul.f32 %v376, 1.442695
  %v378 = vpow.pop %v377
  %v379 = vadd.f32 %v378, 1.0
  %v380 = vrcp.pop %v379
  %v381 = vmul.f32 %v379, %v380
  %v382 = vsub.f32 1.0, %v381
  %v383 = vmul.f32 %v380, %v382
  %v384 = vadd.f32 %v380, %v383
  %vm385 = vweird.f32 %v379
  %vm386 = vweird.f32 %v380
  %vm387 = vmor %vm385, %vm386
  %v388 = vsel %vm387, %v380, %v384
  %v389 = vand.u32 2147483647, %v379
  %vm390 = vcmp.eq.f32.partialorder %v389, 8.507059e+37
  %v391 = vand.u32 %v379, 2147483648
  %v392 = vor.u32 1.1754944e-38, %v391
  %v393 = vsel %vm390, %v392, %v388
  %v394 = vmul.f32 1.0, %v393
  %v395 = vadd.f32 %v349, %v229
  %397 = vrot.lane.b32.xlu0 %v395, 32
  %v398 = vpop.permute.xlu0 %397
  %v400 = vmul.f32 %v374, %v398
  %402 = vrot.lane.b32.xlu0 %v400, 64
  %v403 = vpop.permute.xlu0 %402
  %v405 = vadd.f32 %v60, %v403
  %v406 = vtanh.pop %v405
  %v407 = vsub.f32 1.0, %v394
  %409 = vrot.lane.b32.xlu0 %v406, 96
  %v410 = vpop.permute.xlu0 %409
  %v412 = vmul.f32 %v407, %v410
  %v413 = vmul.f32 %v394, %v262
  %v414 = vadd.f32 %v412, %v413
  %v415 = vsel %vm75, 1, 0
  %416 = vset.pattern.permute.xlu0 0
  %417 = vperm.xlu0 %416, %v415
  %v418 = vpop.permute.xlu0 %417
  %vm419 = vcmp.eq.s32.totalorder %v418, 1
  %v420 = vsel %vm419, %v327, %v256
  %v421 = vsel %vm82, 1, 0
  %422 = vset.pattern.permute.xlu0 0
  %423 = vperm.xlu0 %422, %v421
  %v424 = vpop.permute.xlu0 %423
  %vm425 = vcmp.eq.s32.totalorder %v424, 1
  %v426 = vsel %vm425, %v414, %v262
  %428 = vrot.lane.b32.xlu0 %v420, 96
  %v429 = vpop.permute.xlu0 %428
  %v430 = vsel %vm87, %v429, 0
  %432 = vmatpush.msra.mxu0 0.0
  %433 = vmatpush.msra.mxu0 0.0
  %434 = vmatpush.msra.mxu0 0.0
  %435 = vmatpush.msra.mxu0 0.0
  %436 = vmatpush.msra.mxu0 0.0
  %437 = vmatpush.msra.mxu0 0.0
  %438 = vmatpush.msra.mxu0 0.0
  %439 = vmatpush.msra.mxu0 0.0
  %440 = vmatpush.msra.mxu0 0.0
  %441 = vmatpush.msra.mxu0 0.0
  %442 = vmatpush.msra.mxu0 0.0
  %443 = vmatpush.msra.mxu0 0.0
  %444 = vmatpush.msra.mxu0 %v66
  %445 = vmatpush.msra.mxu0 %v65
  %446 = vmatpush.msra.mxu0 %v64
  %447 = vmatpush.msra.mxu0 %v63
  %448 = vmatmul.f32.gmra.mxu0 %v430
  %v449 = vpop.f32.mrf.mxu0
  %v450 = vadd.f32 0.0, %v449
  %451 = vdwg.mxu0
  %v452 = vadd.f32 %v47, %v450
  %v453 = vxor.u32 %v452, 2147483648
  %v454 = vmul.f32 %v453, 1.442695
  %v455 = vpow.pop %v454
  %v456 = vadd.f32 %v455, 1.0
  %v457 = vrcp.pop %v456
  %v458 = vmul.f32 %v456, %v457
  %v459 = vsub.f32 1.0, %v458
  %v460 = vmul.f32 %v457, %v459
  %v461 = vadd.f32 %v457, %v460
  %vm462 = vweird.f32 %v456
  %vm463 = vweird.f32 %v457
  %vm464 = vmor %vm462, %vm463
  %v465 = vsel %vm464, %v457, %v461
  %v466 = vand.u32 2147483647, %v456
  %vm467 = vcmp.eq.f32.partialorder %v466, 8.507059e+37
  %v468 = vand.u32 %v456, 2147483648
  %v469 = vor.u32 1.1754944e-38, %v468
  %v470 = vsel %vm467, %v469, %v465
  %v471 = vmul.f32 1.0, %v470
  %v472 = vadd.f32 %v450, %v134
  %474 = vrot.lane.b32.xlu0 %v472, 64
  %v475 = vpop.permute.xlu0 %474
  %v477 = vmul.f32 %v471, %v475
  %479 = vrot.lane.b32.xlu0 %v477, 64
  %v480 = vpop.permute.xlu0 %479
  %v482 = vadd.f32 %v47, %v480
  %v483 = vtanh.pop %v482
  %v484 = vsub.f32 1.0, %v471
  %486 = vrot.lane.b32.xlu0 %v483, 96
  %v487 = vpop.permute.xlu0 %486
  %v489 = vmul.f32 %v484, %v487
  %v490 = vmul.f32 %v471, %v420
  %v491 = vadd.f32 %v489, %v490
  %v493 = vsel %vm87, %v426, 0
  %495 = vmatpush.msra.mxu0 0.0
  %496 = vmatpush.msra.mxu0 0.0
  %497 = vmatpush.msra.mxu0 0.0
  %498 = vmatpush.msra.mxu0 0.0
  %499 = vmatpush.msra.mxu0 0.0
  %500 = vmatpush.msra.mxu0 0.0
  %501 = vmatpush.msra.mxu0 0.0
  %502 = vmatpush.msra.mxu0 0.0
  %503 = vmatpush.msra.mxu0 0.0
  %504 = vmatpush.msra.mxu0 0.0
  %505 = vmatpush.msra.mxu0 0.0
  %506 = vmatpush.msra.mxu0 0.0
  %507 = vmatpush.msra.mxu0 %v70
  %508 = vmatpush.msra.mxu0 %v69
  %509 = vmatpush.msra.mxu0 %v68
  %510 = vmatpush.msra.mxu0 %v67
  %511 = vmatmul.f32.gmra.mxu0 %v493
  %v512 = vpop.f32.mrf.mxu0
  %v513 = vadd.f32 0.0, %v512
  %514 = vdwg.mxu0
  %516 = vrot.lane.b32.xlu0 %v513, 96
  %v517 = vpop.permute.xlu0 %516
  %v519 = vadd.f32 %v57, %v517
  %v520 = vxor.u32 %v519, 2147483648
  %v521 = vmul.f32 %v520, 1.442695
  %v522 = vpow.pop %v521
  %v523 = vadd.f32 %v522, 1.0
  %v524 = vrcp.pop %v523
  %v525 = vmul.f32 %v523, %v524
  %v526 = vsub.f32 1.0, %v525
  %v527 = vmul.f32 %v524, %v526
  %v528 = vadd.f32 %v524, %v527
  %vm529 = vweird.f32 %v523
  %vm530 = vweird.f32 %v524
  %vm531 = vmor %vm529, %vm530
  %v532 = vsel %vm531, %v524, %v528
  %v533 = vand.u32 2147483647, %v523
  %vm534 = vcmp.eq.f32.partialorder %v533, 8.507059e+37
  %v535 = vand.u32 %v523, 2147483648
  %v536 = vor.u32 1.1754944e-38, %v535
  %v537 = vsel %vm534, %v536, %v532
  %v538 = vmul.f32 1.0, %v537
  %v539 = vadd.f32 %v58, %v517
  %v540 = vxor.u32 %v539, 2147483648
  %v541 = vmul.f32 %v540, 1.442695
  %v542 = vpow.pop %v541
  %v543 = vadd.f32 %v542, 1.0
  %v544 = vrcp.pop %v543
  %v545 = vmul.f32 %v543, %v544
  %v546 = vsub.f32 1.0, %v545
  %v547 = vmul.f32 %v544, %v546
  %v548 = vadd.f32 %v544, %v547
  %vm549 = vweird.f32 %v543
  %vm550 = vweird.f32 %v544
  %vm551 = vmor %vm549, %vm550
  %v552 = vsel %vm551, %v544, %v548
  %v553 = vand.u32 2147483647, %v543
  %vm554 = vcmp.eq.f32.partialorder %v553, 8.507059e+37
  %v555 = vand.u32 %v543, 2147483648
  %v556 = vor.u32 1.1754944e-38, %v555
  %v557 = vsel %vm554, %v556, %v552
  %v558 = vmul.f32 1.0, %v557
  %v559 = vadd.f32 %v513, %v229
  %561 = vrot.lane.b32.xlu0 %v559, 32
  %v562 = vpop.permute.xlu0 %561
  %v564 = vmul.f32 %v538, %v562
  %566 = vrot.lane.b32.xlu0 %v564, 64
  %v567 = vpop.permute.xlu0 %566
  %v569 = vadd.f32 %v58, %v567
  %v570 = vtanh.pop %v569
  %v571 = vsub.f32 1.0, %v558
  %573 = vrot.lane.b32.xlu0 %v570, 96
  %v574 = vpop.permute.xlu0 %573
  %v576 = vmul.f32 %v571, %v574
  %v577 = vmul.f32 %v558, %v426
  %v578 = vadd.f32 %v576, %v577
  %v579 = vsel %vm76, 1, 0
  %580 = vset.pattern.permute.xlu0 0
  %581 = vperm.xlu0 %580, %v579
  %v582 = vpop.permute.xlu0 %581
  %vm583 = vcmp.eq.s32.totalorder %v582, 1
  %v584 = vsel %vm583, %v491, %v420
  %v585 = vsel %vm81, 1, 0
  %586 = vset.pattern.permute.xlu0 0
  %587 = vperm.xlu0 %586, %v585
  %v588 = vpop.permute.xlu0 %587
  %vm589 = vcmp.eq.s32.totalorder %v588, 1
  %v590 = vsel %vm589, %v578, %v426
  %592 = vrot.lane.b32.xlu0 %v584, 96
  %v593 = vpop.permute.xlu0 %592
  %v594 = vsel %vm87, %v593, 0
  %596 = vmatpush.msra.mxu0 0.0
  %597 = vmatpush.msra.mxu0 0.0
  %598 = vmatpush.msra.mxu0 0.0
  %599 = vmatpush.msra.mxu0 0.0
  %600 = vmatpush.msra.mxu0 0.0
  %601 = vmatpush.msra.mxu0 0.0
  %602 = vmatpush.msra.mxu0 0.0
  %603 = vmatpush.msra.mxu0 0.0
  %604 = vmatpush.msra.mxu0 0.0
  %605 = vmatpush.msra.mxu0 0.0
  %606 = vmatpush.msra.mxu0 0.0
  %607 = vmatpush.msra.mxu0 0.0
  %608 = vmatpush.msra.mxu0 %v66
  %609 = vmatpush.msra.mxu0 %v65
  %610 = vmatpush.msra.mxu0 %v64
  %611 = vmatpush.msra.mxu0 %v63
  %612 = vmatmul.f32.gmra.mxu0 %v594
  %v613 = vpop.f32.mrf.mxu0
  %v614 = vadd.f32 0.0, %v613
  %615 = vdwg.mxu0
  %v616 = vadd.f32 %v49, %v614
  %v617 = vxor.u32 %v616, 2147483648
  %v618 = vmul.f32 %v617, 1.442695
  %v619 = vpow.pop %v618
  %v620 = vadd.f32 %v619, 1.0
  %v621 = vrcp.pop %v620
  %v622 = vmul.f32 %v620, %v621
  %v623 = vsub.f32 1.0, %v622
  %v624 = vmul.f32 %v621, %v623
  %v625 = vadd.f32 %v621, %v624
  %vm626 = vweird.f32 %v620
  %vm627 = vweird.f32 %v621
  %vm628 = vmor %vm626, %vm627
  %v629 = vsel %vm628, %v621, %v625
  %v630 = vand.u32 2147483647, %v620
  %vm631 = vcmp.eq.f32.partialorder %v630, 8.507059e+37
  %v632 = vand.u32 %v620, 2147483648
  %v633 = vor.u32 1.1754944e-38, %v632
  %v634 = vsel %vm631, %v633, %v629
  %v635 = vmul.f32 1.0, %v634
  %v636 = vadd.f32 %v614, %v134
  %638 = vrot.lane.b32.xlu0 %v636, 64
  %v639 = vpop.permute.xlu0 %638
  %v641 = vmul.f32 %v635, %v639
  %643 = vrot.lane.b32.xlu0 %v641, 64
  %v644 = vpop.permute.xlu0 %643
  %v646 = vadd.f32 %v49, %v644
  %v647 = vtanh.pop %v646
  %v648 = vsub.f32 1.0, %v635
  %650 = vrot.lane.b32.xlu0 %v647, 96
  %v651 = vpop.permute.xlu0 %650
  %v653 = vmul.f32 %v648, %v651
  %v654 = vmul.f32 %v635, %v584
  %v655 = vadd.f32 %v653, %v654
  %v657 = vsel %vm87, %v590, 0
  %659 = vmatpush.msra.mxu0 0.0
  %660 = vmatpush.msra.mxu0 0.0
  %661 = vmatpush.msra.mxu0 0.0
  %662 = vmatpush.msra.mxu0 0.0
  %663 = vmatpush.msra.mxu0 0.0
  %664 = vmatpush.msra.mxu0 0.0
  %665 = vmatpush.msra.mxu0 0.0
  %666 = vmatpush.msra.mxu0 0.0
  %667 = vmatpush.msra.mxu0 0.0
  %668 = vmatpush.msra.mxu0 0.0
  %669 = vmatpush.msra.mxu0 0.0
  %670 = vmatpush.msra.mxu0 0.0
  %671 = vmatpush.msra.mxu0 %v70
  %672 = vmatpush.msra.mxu0 %v69
  %673 = vmatpush.msra.mxu0 %v68
  %674 = vmatpush.msra.mxu0 %v67
  %675 = vmatmul.f32.gmra.mxu0 %v657
  %v676 = vpop.f32.mrf.mxu0
  %v677 = vadd.f32 0.0, %v676
  %678 = vdwg.mxu0
  %680 = vrot.lane.b32.xlu0 %v677, 96
  %v681 = vpop.permute.xlu0 %680
  %v683 = vadd.f32 %v55, %v681
  %v684 = vxor.u32 %v683, 2147483648
  %v685 = vmul.f32 %v684, 1.442695
  %v686 = vpow.pop %v685
  %v687 = vadd.f32 %v686, 1.0
  %v688 = vrcp.pop %v687
  %v689 = vmul.f32 %v687, %v688
  %v690 = vsub.f32 1.0, %v689
  %v691 = vmul.f32 %v688, %v690
  %v692 = vadd.f32 %v688, %v691
  %vm693 = vweird.f32 %v687
  %vm694 = vweird.f32 %v688
  %vm695 = vmor %vm693, %vm694
  %v696 = vsel %vm695, %v688, %v692
  %v697 = vand.u32 2147483647, %v687
  %vm698 = vcmp.eq.f32.partialorder %v697, 8.507059e+37
  %v699 = vand.u32 %v687, 2147483648
  %v700 = vor.u32 1.1754944e-38, %v699
  %v701 = vsel %vm698, %v700, %v696
  %v702 = vmul.f32 1.0, %v701
  %v703 = vadd.f32 %v56, %v681
  %v704 = vxor.u32 %v703, 2147483648
  %v705 = vmul.f32 %v704, 1.442695
  %v706 = vpow.pop %v705
  %v707 = vadd.f32 %v706, 1.0
  %v708 = vrcp.pop %v707
  %v709 = vmul.f32 %v707, %v708
  %v710 = vsub.f32 1.0, %v709
  %v711 = vmul.f32 %v708, %v710
  %v712 = vadd.f32 %v708, %v711
  %vm713 = vweird.f32 %v707
  %vm714 = vweird.f32 %v708
  %vm715 = vmor %vm713, %vm714
  %v716 = vsel %vm715, %v708, %v712
  %v717 = vand.u32 2147483647, %v707
  %vm718 = vcmp.eq.f32.partialorder %v717, 8.507059e+37
  %v719 = vand.u32 %v707, 2147483648
  %v720 = vor.u32 1.1754944e-38, %v719
  %v721 = vsel %vm718, %v720, %v716
  %v722 = vmul.f32 1.0, %v721
  %v723 = vadd.f32 %v677, %v229
  %725 = vrot.lane.b32.xlu0 %v723, 32
  %v726 = vpop.permute.xlu0 %725
  %v728 = vmul.f32 %v702, %v726
  %730 = vrot.lane.b32.xlu0 %v728, 64
  %v731 = vpop.permute.xlu0 %730
  %v733 = vadd.f32 %v56, %v731
  %v734 = vtanh.pop %v733
  %v735 = vsub.f32 1.0, %v722
  %737 = vrot.lane.b32.xlu0 %v734, 96
  %v738 = vpop.permute.xlu0 %737
  %v740 = vmul.f32 %v735, %v738
  %v741 = vmul.f32 %v722, %v590
  %v742 = vadd.f32 %v740, %v741
  %v743 = vsel %vm77, 1, 0
  %744 = vset.pattern.permute.xlu0 0
  %745 = vperm.xlu0 %744, %v743
  %v746 = vpop.permute.xlu0 %745
  %vm747 = vcmp.eq.s32.totalorder %v746, 1
  %v748 = vsel %vm747, %v655, %v584
  %v749 = vsel %vm80, 1, 0
  %750 = vset.pattern.permute.xlu0 0
  %751 = vperm.xlu0 %750, %v749
  %v752 = vpop.permute.xlu0 %751
  %vm753 = vcmp.eq.s32.totalorder %v752, 1
  %v754 = vsel %vm753, %v742, %v590
  %756 = vrot.lane.b32.xlu0 %v748, 96
  %v757 = vpop.permute.xlu0 %756
  %v758 = vsel %vm87, %v757, 0
  %760 = vmatpush.msra.mxu0 0.0
  %761 = vmatpush.msra.mxu0 0.0
  %762 = vmatpush.msra.mxu0 0.0
  %763 = vmatpush.msra.mxu0 0.0
  %764 = vmatpush.msra.mxu0 0.0
  %765 = vmatpush.msra.mxu0 0.0
  %766 = vmatpush.msra.mxu0 0.0
  %767 = vmatpush.msra.mxu0 0.0
  %768 = vmatpush.msra.mxu0 0.0
  %769 = vmatpush.msra.mxu0 0.0
  %770 = vmatpush.msra.mxu0 0.0
  %771 = vmatpush.msra.mxu0 0.0
  %772 = vmatpush.msra.mxu0 %v66
  %773 = vmatpush.msra.mxu0 %v65
  %774 = vmatpush.msra.mxu0 %v64
  %775 = vmatpush.msra.mxu0 %v63
  %776 = vmatmul.f32.gmra.mxu0 %v758
  %v777 = vpop.f32.mrf.mxu0
  %v778 = vadd.f32 0.0, %v777
  %779 = vdwg.mxu0
  %v780 = vadd.f32 %v51, %v778
  %v781 = vxor.u32 %v780, 2147483648
  %v782 = vmul.f32 %v781, 1.442695
  %v783 = vpow.pop %v782
  %v784 = vadd.f32 %v783, 1.0
  %v785 = vrcp.pop %v784
  %v786 = vmul.f32 %v784, %v785
  %v787 = vsub.f32 1.0, %v786
  %v788 = vmul.f32 %v785, %v787
  %v789 = vadd.f32 %v785, %v788
  %vm790 = vweird.f32 %v784
  %vm791 = vweird.f32 %v785
  %vm792 = vmor %vm790, %vm791
  %v793 = vsel %vm792, %v785, %v789
  %v794 = vand.u32 2147483647, %v784
  %vm795 = vcmp.eq.f32.partialorder %v794, 8.507059e+37
  %v796 = vand.u32 %v784, 2147483648
  %v797 = vor.u32 1.1754944e-38, %v796
  %v798 = vsel %vm795, %v797, %v793
  %v799 = vmul.f32 1.0, %v798
  %v800 = vadd.f32 %v778, %v134
  %802 = vrot.lane.b32.xlu0 %v800, 64
  %v803 = vpop.permute.xlu0 %802
  %v805 = vmul.f32 %v799, %v803
  %807 = vrot.lane.b32.xlu0 %v805, 64
  %v808 = vpop.permute.xlu0 %807
  %v810 = vadd.f32 %v51, %v808
  %v811 = vtanh.pop %v810
  %v812 = vsub.f32 1.0, %v799
  %814 = vrot.lane.b32.xlu0 %v811, 96
  %v815 = vpop.permute.xlu0 %814
  %v817 = vmul.f32 %v812, %v815
  %v818 = vmul.f32 %v799, %v748
  %v819 = vadd.f32 %v817, %v818
  %v821 = vsel %vm87, %v754, 0
  %823 = vmatpush.msra.mxu0 0.0
  %824 = vmatpush.msra.mxu0 0.0
  %825 = vmatpush.msra.mxu0 0.0
  %826 = vmatpush.msra.mxu0 0.0
  %827 = vmatpush.msra.mxu0 0.0
  %828 = vmatpush.msra.mxu0 0.0
  %829 = vmatpush.msra.mxu0 0.0
  %830 = vmatpush.msra.mxu0 0.0
  %831 = vmatpush.msra.mxu0 0.0
  %832 = vmatpush.msra.mxu0 0.0
  %833 = vmatpush.msra.mxu0 0.0
  %834 = vmatpush.msra.mxu0 0.0
  %835 = vmatpush.msra.mxu0 %v70
  %836 = vmatpush.msra.mxu0 %v69
  %837 = vmatpush.msra.mxu0 %v68
  %838 = vmatpush.msra.mxu0 %v67
  %839 = vmatmul.f32.gmra.mxu0 %v821
  %v840 = vpop.f32.mrf.mxu0
  %v841 = vadd.f32 0.0, %v840
  %842 = vdwg.mxu0
  %844 = vrot.lane.b32.xlu0 %v841, 96
  %v845 = vpop.permute.xlu0 %844
  %v847 = vadd.f32 %v53, %v845
  %v848 = vxor.u32 %v847, 2147483648
  %v849 = vmul.f32 %v848, 1.442695
  %v850 = vpow.pop %v849
  %v851 = vadd.f32 %v850, 1.0
  %v852 = vrcp.pop %v851
  %v853 = vmul.f32 %v851, %v852
  %v854 = vsub.f32 1.0, %v853
  %v855 = vmul.f32 %v852, %v854
  %v856 = vadd.f32 %v852, %v855
  %vm857 = vweird.f32 %v851
  %vm858 = vweird.f32 %v852
  %vm859 = vmor %vm857, %vm858
  %v860 = vsel %vm859, %v852, %v856
  %v861 = vand.u32 2147483647, %v851
  %vm862 = vcmp.eq.f32.partialorder %v861, 8.507059e+37
  %v863 = vand.u32 %v851, 2147483648
  %v864 = vor.u32 1.1754944e-38, %v863
  %v865 = vsel %vm862, %v864, %v860
  %v866 = vmul.f32 1.0, %v865
  %v867 = vadd.f32 %v54, %v845
  %v868 = vxor.u32 %v867, 2147483648
  %v869 = vmul.f32 %v868, 1.442695
  %v870 = vpow.pop %v869
  %v871 = vadd.f32 %v870, 1.0
  %v872 = vrcp.pop %v871
  %v873 = vmul.f32 %v871, %v872
  %v874 = vsub.f32 1.0, %v873
  %v875 = vmul.f32 %v872, %v874
  %v876 = vadd.f32 %v872, %v875
  %vm877 = vweird.f32 %v871
  %vm878 = vweird.f32 %v872
  %vm879 = vmor %vm877, %vm878
  %v880 = vsel %vm879, %v872, %v876
  %v881 = vand.u32 2147483647, %v871
  %vm882 = vcmp.eq.f32.partialorder %v881, 8.507059e+37
  %v883 = vand.u32 %v871, 2147483648
  %v884 = vor.u32 1.1754944e-38, %v883
  %v885 = vsel %vm882, %v884, %v880
  %v886 = vmul.f32 1.0, %v885
  %v887 = vadd.f32 %v841, %v229
  %889 = vrot.lane.b32.xlu0 %v887, 32
  %v890 = vpop.permute.xlu0 %889
  %v892 = vmul.f32 %v866, %v890
  %894 = vrot.lane.b32.xlu0 %v892, 64
  %v895 = vpop.permute.xlu0 %894
  %v897 = vadd.f32 %v54, %v895
  %v898 = vtanh.pop %v897
  %v899 = vsub.f32 1.0, %v886
  %901 = vrot.lane.b32.xlu0 %v898, 96
  %v902 = vpop.permute.xlu0 %901
  %v904 = vmul.f32 %v899, %v902
  %v905 = vmul.f32 %v886, %v754
  %v906 = vadd.f32 %v904, %v905
  %v907 = vsel %vm78, 1, 0
  %908 = vset.pattern.permute.xlu0 0
  %909 = vperm.xlu0 %908, %v907
  %v910 = vpop.permute.xlu0 %909
  %vm911 = vcmp.eq.s32.totalorder %v910, 1
  %v912 = vsel %vm911, %v819, %v748
  %v913 = vsel %vm79, 1, 0
  %914 = vset.pattern.permute.xlu0 0
  %915 = vperm.xlu0 %914, %v913
  %v916 = vpop.permute.xlu0 %915
  %vm917 = vcmp.eq.s32.totalorder %v916, 1
  %v918 = vsel %vm917, %v906, %v754
  %920 = vrot.lane.b32.xlu0 %v912, 96
  %v921 = vpop.permute.xlu0 %920
  %v922 = vsel %vm87, %v921, 0
  %924 = vmatpush.msra.mxu0 0.0
  %925 = vmatpush.msra.mxu0 0.0
  %926 = vmatpush.msra.mxu0 0.0
  %927 = vmatpush.msra.mxu0 0.0
  %928 = vmatpush.msra.mxu0 0.0
  %929 = vmatpush.msra.mxu0 0.0
  %930 = vmatpush.msra.mxu0 0.0
  %931 = vmatpush.msra.mxu0 0.0
  %932 = vmatpush.msra.mxu0 0.0
  %933 = vmatpush.msra.mxu0 0.0
  %934 = vmatpush.msra.mxu0 0.0
  %935 = vmatpush.msra.mxu0 0.0
  %936 = vmatpush.msra.mxu0 %v66
  %937 = vmatpush.msra.mxu0 %v65
  %938 = vmatpush.msra.mxu0 %v64
  %939 = vmatpush.msra.mxu0 %v63
  %940 = vmatmul.f32.gmra.mxu0 %v922
  %v941 = vpop.f32.mrf.mxu0
  %v942 = vadd.f32 0.0, %v941
  %943 = vdwg.mxu0
  %v944 = vadd.f32 %v53, %v942
  %v945 = vxor.u32 %v944, 2147483648
  %v946 = vmul.f32 %v945, 1.442695
  %v947 = vpow.pop %v946
  %v948 = vadd.f32 %v947, 1.0
  %v949 = vrcp.pop %v948
  %v950 = vmul.f32 %v948, %v949
  %v951 = vsub.f32 1.0, %v950
  %v952 = vmul.f32 %v949, %v951
  %v953 = vadd.f32 %v949, %v952
  %vm954 = vweird.f32 %v948
  %vm955 = vweird.f32 %v949
  %vm956 = vmor %vm954, %vm955
  %v957 = vsel %vm956, %v949, %v953
  %v958 = vand.u32 2147483647, %v948
  %vm959 = vcmp.eq.f32.partialorder %v958, 8.507059e+37
  %v960 = vand.u32 %v948, 2147483648
  %v961 = vor.u32 1.1754944e-38, %v960
  %v962 = vsel %vm959, %v961, %v957
  %v963 = vmul.f32 1.0, %v962
  %v964 = vadd.f32 %v942, %v134
  %966 = vrot.lane.b32.xlu0 %v964, 64
  %v967 = vpop.permute.xlu0 %966
  %v969 = vmul.f32 %v963, %v967
  %971 = vrot.lane.b32.xlu0 %v969, 64
  %v972 = vpop.permute.xlu0 %971
  %v974 = vadd.f32 %v53, %v972
  %v975 = vtanh.pop %v974
  %v976 = vsub.f32 1.0, %v963
  %978 = vrot.lane.b32.xlu0 %v975, 96
  %v979 = vpop.permute.xlu0 %978
  %v981 = vmul.f32 %v976, %v979
  %v982 = vmul.f32 %v963, %v912
  %v983 = vadd.f32 %v981, %v982
  %v985 = vsel %vm87, %v918, 0
  %987 = vmatpush.msra.mxu0 0.0
  %988 = vmatpush.msra.mxu0 0.0
  %989 = vmatpush.msra.mxu0 0.0
  %990 = vmatpush.msra.mxu0 0.0
  %991 = vmatpush.msra.mxu0 0.0
  %992 = vmatpush.msra.mxu0 0.0
  %993 = vmatpush.msra.mxu0 0.0
  %994 = vmatpush.msra.mxu0 0.0
  %995 = vmatpush.msra.mxu0 0.0
  %996 = vmatpush.msra.mxu0 0.0
  %997 = vmatpush.msra.mxu0 0.0
  %998 = vmatpush.msra.mxu0 0.0
  %999 = vmatpush.msra.mxu0 %v70
  %1000 = vmatpush.msra.mxu0 %v69
  %1001 = vmatpush.msra.mxu0 %v68
  %1002 = vmatpush.msra.mxu0 %v67
  %1003 = vmatmul.f32.gmra.mxu0 %v985
  %v1004 = vpop.f32.mrf.mxu0
  %v1005 = vadd.f32 0.0, %v1004
  %1006 = vdwg.mxu0
  %1008 = vrot.lane.b32.xlu0 %v1005, 96
  %v1009 = vpop.permute.xlu0 %1008
  %v1011 = vadd.f32 %v51, %v1009
  %v1012 = vxor.u32 %v1011, 2147483648
  %v1013 = vmul.f32 %v1012, 1.442695
  %v1014 = vpow.pop %v1013
  %v1015 = vadd.f32 %v1014, 1.0
  %v1016 = vrcp.pop %v1015
  %v1017 = vmul.f32 %v1015, %v1016
  %v1018 = vsub.f32 1.0, %v1017
  %v1019 = vmul.f32 %v1016, %v1018
  %v1020 = vadd.f32 %v1016, %v1019
  %vm1021 = vweird.f32 %v1015
  %vm1022 = vweird.f32 %v1016
  %vm1023 = vmor %vm1021, %vm1022
  %v1024 = vsel %vm1023, %v1016, %v1020
  %v1025 = vand.u32 2147483647, %v1015
  %vm1026 = vcmp.eq.f32.partialorder %v1025, 8.507059e+37
  %v1027 = vand.u32 %v1015, 2147483648
  %v1028 = vor.u32 1.1754944e-38, %v1027
  %v1029 = vsel %vm1026, %v1028, %v1024
  %v1030 = vmul.f32 1.0, %v1029
  %v1031 = vadd.f32 %v52, %v1009
  %v1032 = vxor.u32 %v1031, 2147483648
  %v1033 = vmul.f32 %v1032, 1.442695
  %v1034 = vpow.pop %v1033
  %v1035 = vadd.f32 %v1034, 1.0
  %v1036 = vrcp.pop %v1035
  %v1037 = vmul.f32 %v1035, %v1036
  %v1038 = vsub.f32 1.0, %v1037
  %v1039 = vmul.f32 %v1036, %v1038
  %v1040 = vadd.f32 %v1036, %v1039
  %vm1041 = vweird.f32 %v1035
  %vm1042 = vweird.f32 %v1036
  %vm1043 = vmor %vm1041, %vm1042
  %v1044 = vsel %vm1043, %v1036, %v1040
  %v1045 = vand.u32 2147483647, %v1035
  %vm1046 = vcmp.eq.f32.partialorder %v1045, 8.507059e+37
  %v1047 = vand.u32 %v1035, 2147483648
  %v1048 = vor.u32 1.1754944e-38, %v1047
  %v1049 = vsel %vm1046, %v1048, %v1044
  %v1050 = vmul.f32 1.0, %v1049
  %v1051 = vadd.f32 %v1005, %v229
  %1053 = vrot.lane.b32.xlu0 %v1051, 32
  %v1054 = vpop.permute.xlu0 %1053
  %v1056 = vmul.f32 %v1030, %v1054
  %1058 = vrot.lane.b32.xlu0 %v1056, 64
  %v1059 = vpop.permute.xlu0 %1058
  %v1061 = vadd.f32 %v52, %v1059
  %v1062 = vtanh.pop %v1061
  %v1063 = vsub.f32 1.0, %v1050
  %1065 = vrot.lane.b32.xlu0 %v1062, 96
  %v1066 = vpop.permute.xlu0 %1065
  %v1068 = vmul.f32 %v1063, %v1066
  %v1069 = vmul.f32 %v1050, %v918
  %v1070 = vadd.f32 %v1068, %v1069
  %v1071 = vsel %vm917, %v983, %v912
  %v1072 = vsel %vm911, %v1070, %v918
  %1074 = vrot.lane.b32.xlu0 %v1071, 96
  %v1075 = vpop.permute.xlu0 %1074
  %v1076 = vsel %vm87, %v1075, 0
  %1078 = vmatpush.msra.mxu0 0.0
  %1079 = vmatpush.msra.mxu0 0.0
  %1080 = vmatpush.msra.mxu0 0.0
  %1081 = vmatpush.msra.mxu0 0.0
  %1082 = vmatpush.msra.mxu0 0.0
  %1083 = vmatpush.msra.mxu0 0.0
  %1084 = vmatpush.msra.mxu0 0.0
  %1085 = vmatpush.msra.mxu0 0.0
  %1086 = vmatpush.msra.mxu0 0.0
  %1087 = vmatpush.msra.mxu0 0.0
  %1088 = vmatpush.msra.mxu0 0.0
  %1089 = vmatpush.msra.mxu0 0.0
  %1090 = vmatpush.msra.mxu0 %v66
  %1091 = vmatpush.msra.mxu0 %v65
  %1092 = vmatpush.msra.mxu0 %v64
  %1093 = vmatpush.msra.mxu0 %v63
  %1094 = vmatmul.f32.gmra.mxu0 %v1076
  %v1095 = vpop.f32.mrf.mxu0
  %v1096 = vadd.f32 0.0, %v1095
  %1097 = vdwg.mxu0
  %v1098 = vadd.f32 %v55, %v1096
  %v1099 = vxor.u32 %v1098, 2147483648
  %v1100 = vmul.f32 %v1099, 1.442695
  %v1101 = vpow.pop %v1100
  %v1102 = vadd.f32 %v1101, 1.0
  %v1103 = vrcp.pop %v1102
  %v1104 = vmul.f32 %v1102, %v1103
  %v1105 = vsub.f32 1.0, %v1104
  %v1106 = vmul.f32 %v1103, %v1105
  %v1107 = vadd.f32 %v1103, %v1106
  %vm1108 = vweird.f32 %v1102
  %vm1109 = vweird.f32 %v1103
  %vm1110 = vmor %vm1108, %vm1109
  %v1111 = vsel %vm1110, %v1103, %v1107
  %v1112 = vand.u32 2147483647, %v1102
  %vm1113 = vcmp.eq.f32.partialorder %v1112, 8.507059e+37
  %v1114 = vand.u32 %v1102, 2147483648
  %v1115 = vor.u32 1.1754944e-38, %v1114
  %v1116 = vsel %vm1113, %v1115, %v1111
  %v1117 = vmul.f32 1.0, %v1116
  %v1118 = vadd.f32 %v1096, %v134
  %1120 = vrot.lane.b32.xlu0 %v1118, 64
  %v1121 = vpop.permute.xlu0 %1120
  %v1123 = vmul.f32 %v1117, %v1121
  %1125 = vrot.lane.b32.xlu0 %v1123, 64
  %v1126 = vpop.permute.xlu0 %1125
  %v1128 = vadd.f32 %v55, %v1126
  %v1129 = vtanh.pop %v1128
  %v1130 = vsub.f32 1.0, %v1117
  %1132 = vrot.lane.b32.xlu0 %v1129, 96
  %v1133 = vpop.permute.xlu0 %1132
  %v1135 = vmul.f32 %v1130, %v1133
  %v1136 = vmul.f32 %v1117, %v1071
  %v1137 = vadd.f32 %v1135, %v1136
  %v1139 = vsel %vm87, %v1072, 0
  %1141 = vmatpush.msra.mxu0 0.0
  %1142 = vmatpush.msra.mxu0 0.0
  %1143 = vmatpush.msra.mxu0 0.0
  %1144 = vmatpush.msra.mxu0 0.0
  %1145 = vmatpush.msra.mxu0 0.0
  %1146 = vmatpush.msra.mxu0 0.0
  %1147 = vmatpush.msra.mxu0 0.0
  %1148 = vmatpush.msra.mxu0 0.0
  %1149 = vmatpush.msra.mxu0 0.0
  %1150 = vmatpush.msra.mxu0 0.0
  %1151 = vmatpush.msra.mxu0 0.0
  %1152 = vmatpush.msra.mxu0 0.0
  %1153 = vmatpush.msra.mxu0 %v70
  %1154 = vmatpush.msra.mxu0 %v69
  %1155 = vmatpush.msra.mxu0 %v68
  %1156 = vmatpush.msra.mxu0 %v67
  %1157 = vmatmul.f32.gmra.mxu0 %v1139
  %v1158 = vpop.f32.mrf.mxu0
  %v1159 = vadd.f32 0.0, %v1158
  %1160 = vdwg.mxu0
  %1162 = vrot.lane.b32.xlu0 %v1159, 96
  %v1163 = vpop.permute.xlu0 %1162
  %v1165 = vadd.f32 %v49, %v1163
  %v1166 = vxor.u32 %v1165, 2147483648
  %v1167 = vmul.f32 %v1166, 1.442695
  %v1168 = vpow.pop %v1167
  %v1169 = vadd.f32 %v1168, 1.0
  %v1170 = vrcp.pop %v1169
  %v1171 = vmul.f32 %v1169, %v1170
  %v1172 = vsub.f32 1.0, %v1171
  %v1173 = vmul.f32 %v1170, %v1172
  %v1174 = vadd.f32 %v1170, %v1173
  %vm1175 = vweird.f32 %v1169
  %vm1176 = vweird.f32 %v1170
  %vm1177 = vmor %vm1175, %vm1176
  %v1178 = vsel %vm1177, %v1170, %v1174
  %v1179 = vand.u32 2147483647, %v1169
  %vm1180 = vcmp.eq.f32.partialorder %v1179, 8.507059e+37
  %v1181 = vand.u32 %v1169, 2147483648
  %v1182 = vor.u32 1.1754944e-38, %v1181
  %v1183 = vsel %vm1180, %v1182, %v1178
  %v1184 = vmul.f32 1.0, %v1183
  %v1185 = vadd.f32 %v50, %v1163
  %v1186 = vxor.u32 %v1185, 2147483648
  %v1187 = vmul.f32 %v1186, 1.442695
  %v1188 = vpow.pop %v1187
  %v1189 = vadd.f32 %v1188, 1.0
  %v1190 = vrcp.pop %v1189
  %v1191 = vmul.f32 %v1189, %v1190
  %v1192 = vsub.f32 1.0, %v1191
  %v1193 = vmul.f32 %v1190, %v1192
  %v1194 = vadd.f32 %v1190, %v1193
  %vm1195 = vweird.f32 %v1189
  %vm1196 = vweird.f32 %v1190
  %vm1197 = vmor %vm1195, %vm1196
  %v1198 = vsel %vm1197, %v1190, %v1194
  %v1199 = vand.u32 2147483647, %v1189
  %vm1200 = vcmp.eq.f32.partialorder %v1199, 8.507059e+37
  %v1201 = vand.u32 %v1189, 2147483648
  %v1202 = vor.u32 1.1754944e-38, %v1201
  %v1203 = vsel %vm1200, %v1202, %v1198
  %v1204 = vmul.f32 1.0, %v1203
  %v1205 = vadd.f32 %v1159, %v229
  %1207 = vrot.lane.b32.xlu0 %v1205, 32
  %v1208 = vpop.permute.xlu0 %1207
  %v1210 = vmul.f32 %v1184, %v1208
  %1212 = vrot.lane.b32.xlu0 %v1210, 64
  %v1213 = vpop.permute.xlu0 %1212
  %v1215 = vadd.f32 %v50, %v1213
  %v1216 = vtanh.pop %v1215
  %v1217 = vsub.f32 1.0, %v1204
  %1219 = vrot.lane.b32.xlu0 %v1216, 96
  %v1220 = vpop.permute.xlu0 %1219
  %v1222 = vmul.f32 %v1217, %v1220
  %v1223 = vmul.f32 %v1204, %v1072
  %v1224 = vadd.f32 %v1222, %v1223
  %v1225 = vsel %vm753, %v1137, %v1071
  %v1226 = vsel %vm747, %v1224, %v1072
  %1228 = vrot.lane.b32.xlu0 %v1225, 96
  %v1229 = vpop.permute.xlu0 %1228
  %v1230 = vsel %vm87, %v1229, 0
  %1232 = vmatpush.msra.mxu0 0.0
  %1233 = vmatpush.msra.mxu0 0.0
  %1234 = vmatpush.msra.mxu0 0.0
  %1235 = vmatpush.msra.mxu0 0.0
  %1236 = vmatpush.msra.mxu0 0.0
  %1237 = vmatpush.msra.mxu0 0.0
  %1238 = vmatpush.msra.mxu0 0.0
  %1239 = vmatpush.msra.mxu0 0.0
  %1240 = vmatpush.msra.mxu0 0.0
  %1241 = vmatpush.msra.mxu0 0.0
  %1242 = vmatpush.msra.mxu0 0.0
  %1243 = vmatpush.msra.mxu0 0.0
  %1244 = vmatpush.msra.mxu0 %v66
  %1245 = vmatpush.msra.mxu0 %v65
  %1246 = vmatpush.msra.mxu0 %v64
  %1247 = vmatpush.msra.mxu0 %v63
  %1248 = vmatmul.f32.gmra.mxu0 %v1230
  %v1249 = vpop.f32.mrf.mxu0
  %v1250 = vadd.f32 0.0, %v1249
  %1251 = vdwg.mxu0
  %v1252 = vadd.f32 %v57, %v1250
  %v1253 = vxor.u32 %v1252, 2147483648
  %v1254 = vmul.f32 %v1253, 1.442695
  %v1255 = vpow.pop %v1254
  %v1256 = vadd.f32 %v1255, 1.0
  %v1257 = vrcp.pop %v1256
  %v1258 = vmul.f32 %v1256, %v1257
  %v1259 = vsub.f32 1.0, %v1258
  %v1260 = vmul.f32 %v1257, %v1259
  %v1261 = vadd.f32 %v1257, %v1260
  %vm1262 = vweird.f32 %v1256
  %vm1263 = vweird.f32 %v1257
  %vm1264 = vmor %vm1262, %vm1263
  %v1265 = vsel %vm1264, %v1257, %v1261
  %v1266 = vand.u32 2147483647, %v1256
  %vm1267 = vcmp.eq.f32.partialorder %v1266, 8.507059e+37
  %v1268 = vand.u32 %v1256, 2147483648
  %v1269 = vor.u32 1.1754944e-38, %v1268
  %v1270 = vsel %vm1267, %v1269, %v1265
  %v1271 = vmul.f32 1.0, %v1270
  %v1272 = vadd.f32 %v1250, %v134
  %1274 = vrot.lane.b32.xlu0 %v1272, 64
  %v1275 = vpop.permute.xlu0 %1274
  %v1277 = vmul.f32 %v1271, %v1275
  %1279 = vrot.lane.b32.xlu0 %v1277, 64
  %v1280 = vpop.permute.xlu0 %1279
  %v1282 = vadd.f32 %v57, %v1280
  %v1283 = vtanh.pop %v1282
  %v1284 = vsub.f32 1.0, %v1271
  %1286 = vrot.lane.b32.xlu0 %v1283, 96
  %v1287 = vpop.permute.xlu0 %1286
  %v1289 = vmul.f32 %v1284, %v1287
  %v1290 = vmul.f32 %v1271, %v1225
  %v1291 = vadd.f32 %v1289, %v1290
  %v1293 = vsel %vm87, %v1226, 0
  %1295 = vmatpush.msra.mxu0 0.0
  %1296 = vmatpush.msra.mxu0 0.0
  %1297 = vmatpush.msra.mxu0 0.0
  %1298 = vmatpush.msra.mxu0 0.0
  %1299 = vmatpush.msra.mxu0 0.0
  %1300 = vmatpush.msra.mxu0 0.0
  %1301 = vmatpush.msra.mxu0 0.0
  %1302 = vmatpush.msra.mxu0 0.0
  %1303 = vmatpush.msra.mxu0 0.0
  %1304 = vmatpush.msra.mxu0 0.0
  %1305 = vmatpush.msra.mxu0 0.0
  %1306 = vmatpush.msra.mxu0 0.0
  %1307 = vmatpush.msra.mxu0 %v70
  %1308 = vmatpush.msra.mxu0 %v69
  %1309 = vmatpush.msra.mxu0 %v68
  %1310 = vmatpush.msra.mxu0 %v67
  %1311 = vmatmul.f32.gmra.mxu0 %v1293
  %v1312 = vpop.f32.mrf.mxu0
  %v1313 = vadd.f32 0.0, %v1312
  %1314 = vdwg.mxu0
  %1316 = vrot.lane.b32.xlu0 %v1313, 96
  %v1317 = vpop.permute.xlu0 %1316
  %v1319 = vadd.f32 %v47, %v1317
  %v1320 = vxor.u32 %v1319, 2147483648
  %v1321 = vmul.f32 %v1320, 1.442695
  %v1322 = vpow.pop %v1321
  %v1323 = vadd.f32 %v1322, 1.0
  %v1324 = vrcp.pop %v1323
  %v1325 = vmul.f32 %v1323, %v1324
  %v1326 = vsub.f32 1.0, %v1325
  %v1327 = vmul.f32 %v1324, %v1326
  %v1328 = vadd.f32 %v1324, %v1327
  %vm1329 = vweird.f32 %v1323
  %vm1330 = vweird.f32 %v1324
  %vm1331 = vmor %vm1329, %vm1330
  %v1332 = vsel %vm1331, %v1324, %v1328
  %v1333 = vand.u32 2147483647, %v1323
  %vm1334 = vcmp.eq.f32.partialorder %v1333, 8.507059e+37
  %v1335 = vand.u32 %v1323, 2147483648
  %v1336 = vor.u32 1.1754944e-38, %v1335
  %v1337 = vsel %vm1334, %v1336, %v1332
  %v1338 = vmul.f32 1.0, %v1337
  %v1339 = vadd.f32 %v48, %v1317
  %v1340 = vxor.u32 %v1339, 2147483648
  %v1341 = vmul.f32 %v1340, 1.442695
  %v1342 = vpow.pop %v1341
  %v1343 = vadd.f32 %v1342, 1.0
  %v1344 = vrcp.pop %v1343
  %v1345 = vmul.f32 %v1343, %v1344
  %v1346 = vsub.f32 1.0, %v1345
  %v1347 = vmul.f32 %v1344, %v1346
  %v1348 = vadd.f32 %v1344, %v1347
  %vm1349 = vweird.f32 %v1343
  %vm1350 = vweird.f32 %v1344
  %vm1351 = vmor %vm1349, %vm1350
  %v1352 = vsel %vm1351, %v1344, %v1348
  %v1353 = vand.u32 2147483647, %v1343
  %vm1354 = vcmp.eq.f32.partialorder %v1353, 8.507059e+37
  %v1355 = vand.u32 %v1343, 2147483648
  %v1356 = vor.u32 1.1754944e-38, %v1355
  %v1357 = vsel %vm1354, %v1356, %v1352
  %v1358 = vmul.f32 1.0, %v1357
  %v1359 = vadd.f32 %v1313, %v229
  %1361 = vrot.lane.b32.xlu0 %v1359, 32
  %v1362 = vpop.permute.xlu0 %1361
  %v1364 = vmul.f32 %v1338, %v1362
  %1366 = vrot.lane.b32.xlu0 %v1364, 64
  %v1367 = vpop.permute.xlu0 %1366
  %v1369 = vadd.f32 %v48, %v1367
  %v1370 = vtanh.pop %v1369
  %v1371 = vsub.f32 1.0, %v1358
  %1373 = vrot.lane.b32.xlu0 %v1370, 96
  %v1374 = vpop.permute.xlu0 %1373
  %v1376 = vmul.f32 %v1371, %v1374
  %v1377 = vmul.f32 %v1358, %v1226
  %v1378 = vadd.f32 %v1376, %v1377
  %v1379 = vsel %vm589, %v1291, %v1225
  %v1380 = vsel %vm583, %v1378, %v1226
  %1382 = vrot.lane.b32.xlu0 %v1379, 96
  %v1383 = vpop.permute.xlu0 %1382
  %v1384 = vsel %vm87, %v1383, 0
  %1386 = vmatpush.msra.mxu0 0.0
  %1387 = vmatpush.msra.mxu0 0.0
  %1388 = vmatpush.msra.mxu0 0.0
  %1389 = vmatpush.msra.mxu0 0.0
  %1390 = vmatpush.msra.mxu0 0.0
  %1391 = vmatpush.msra.mxu0 0.0
  %1392 = vmatpush.msra.mxu0 0.0
  %1393 = vmatpush.msra.mxu0 0.0
  %1394 = vmatpush.msra.mxu0 0.0
  %1395 = vmatpush.msra.mxu0 0.0
  %1396 = vmatpush.msra.mxu0 0.0
  %1397 = vmatpush.msra.mxu0 0.0
  %1398 = vmatpush.msra.mxu0 %v66
  %1399 = vmatpush.msra.mxu0 %v65
  %1400 = vmatpush.msra.mxu0 %v64
  %1401 = vmatpush.msra.mxu0 %v63
  %1402 = vmatmul.f32.gmra.mxu0 %v1384
  %v1403 = vpop.f32.mrf.mxu0
  %v1404 = vadd.f32 0.0, %v1403
  %1405 = vdwg.mxu0
  %v1406 = vadd.f32 %v59, %v1404
  %v1407 = vxor.u32 %v1406, 2147483648
  %v1408 = vmul.f32 %v1407, 1.442695
  %v1409 = vpow.pop %v1408
  %v1410 = vadd.f32 %v1409, 1.0
  %v1411 = vrcp.pop %v1410
  %v1412 = vmul.f32 %v1410, %v1411
  %v1413 = vsub.f32 1.0, %v1412
  %v1414 = vmul.f32 %v1411, %v1413
  %v1415 = vadd.f32 %v1411, %v1414
  %vm1416 = vweird.f32 %v1410
  %vm1417 = vweird.f32 %v1411
  %vm1418 = vmor %vm1416, %vm1417
  %v1419 = vsel %vm1418, %v1411, %v1415
  %v1420 = vand.u32 2147483647, %v1410
  %vm1421 = vcmp.eq.f32.partialorder %v1420, 8.507059e+37
  %v1422 = vand.u32 %v1410, 2147483648
  %v1423 = vor.u32 1.1754944e-38, %v1422
  %v1424 = vsel %vm1421, %v1423, %v1419
  %v1425 = vmul.f32 1.0, %v1424
  %v1426 = vadd.f32 %v1404, %v134
  %1428 = vrot.lane.b32.xlu0 %v1426, 64
  %v1429 = vpop.permute.xlu0 %1428
  %v1431 = vmul.f32 %v1425, %v1429
  %1433 = vrot.lane.b32.xlu0 %v1431, 64
  %v1434 = vpop.permute.xlu0 %1433
  %v1436 = vadd.f32 %v59, %v1434
  %v1437 = vtanh.pop %v1436
  %v1438 = vsub.f32 1.0, %v1425
  %1440 = vrot.lane.b32.xlu0 %v1437, 96
  %v1441 = vpop.permute.xlu0 %1440
  %v1443 = vmul.f32 %v1438, %v1441
  %v1444 = vmul.f32 %v1425, %v1379
  %v1445 = vadd.f32 %v1443, %v1444
  %v1447 = vsel %vm87, %v1380, 0
  %1449 = vmatpush.msra.mxu0 0.0
  %1450 = vmatpush.msra.mxu0 0.0
  %1451 = vmatpush.msra.mxu0 0.0
  %1452 = vmatpush.msra.mxu0 0.0
  %1453 = vmatpush.msra.mxu0 0.0
  %1454 = vmatpush.msra.mxu0 0.0
  %1455 = vmatpush.msra.mxu0 0.0
  %1456 = vmatpush.msra.mxu0 0.0
  %1457 = vmatpush.msra.mxu0 0.0
  %1458 = vmatpush.msra.mxu0 0.0
  %1459 = vmatpush.msra.mxu0 0.0
  %1460 = vmatpush.msra.mxu0 0.0
  %1461 = vmatpush.msra.mxu0 %v70
  %1462 = vmatpush.msra.mxu0 %v69
  %1463 = vmatpush.msra.mxu0 %v68
  %1464 = vmatpush.msra.mxu0 %v67
  %1465 = vmatmul.f32.gmra.mxu0 %v1447
  %v1466 = vpop.f32.mrf.mxu0
  %v1467 = vadd.f32 0.0, %v1466
  %1468 = vdwg.mxu0
  %1470 = vrot.lane.b32.xlu0 %v1467, 96
  %v1471 = vpop.permute.xlu0 %1470
  %v1473 = vadd.f32 %v45, %v1471
  %v1474 = vxor.u32 %v1473, 2147483648
  %v1475 = vmul.f32 %v1474, 1.442695
  %v1476 = vpow.pop %v1475
  %v1477 = vadd.f32 %v1476, 1.0
  %v1478 = vrcp.pop %v1477
  %v1479 = vmul.f32 %v1477, %v1478
  %v1480 = vsub.f32 1.0, %v1479
  %v1481 = vmul.f32 %v1478, %v1480
  %v1482 = vadd.f32 %v1478, %v1481
  %vm1483 = vweird.f32 %v1477
  %vm1484 = vweird.f32 %v1478
  %vm1485 = vmor %vm1483, %vm1484
  %v1486 = vsel %vm1485, %v1478, %v1482
  %v1487 = vand.u32 2147483647, %v1477
  %vm1488 = vcmp.eq.f32.partialorder %v1487, 8.507059e+37
  %v1489 = vand.u32 %v1477, 2147483648
  %v1490 = vor.u32 1.1754944e-38, %v1489
  %v1491 = vsel %vm1488, %v1490, %v1486
  %v1492 = vmul.f32 1.0, %v1491
  %v1493 = vadd.f32 %v46, %v1471
  %v1494 = vxor.u32 %v1493, 2147483648
  %v1495 = vmul.f32 %v1494, 1.442695
  %v1496 = vpow.pop %v1495
  %v1497 = vadd.f32 %v1496, 1.0
  %v1498 = vrcp.pop %v1497
  %v1499 = vmul.f32 %v1497, %v1498
  %v1500 = vsub.f32 1.0, %v1499
  %v1501 = vmul.f32 %v1498, %v1500
  %v1502 = vadd.f32 %v1498, %v1501
  %vm1503 = vweird.f32 %v1497
  %vm1504 = vweird.f32 %v1498
  %vm1505 = vmor %vm1503, %vm1504
  %v1506 = vsel %vm1505, %v1498, %v1502
  %v1507 = vand.u32 2147483647, %v1497
  %vm1508 = vcmp.eq.f32.partialorder %v1507, 8.507059e+37
  %v1509 = vand.u32 %v1497, 2147483648
  %v1510 = vor.u32 1.1754944e-38, %v1509
  %v1511 = vsel %vm1508, %v1510, %v1506
  %v1512 = vmul.f32 1.0, %v1511
  %v1513 = vadd.f32 %v1467, %v229
  %1515 = vrot.lane.b32.xlu0 %v1513, 32
  %v1516 = vpop.permute.xlu0 %1515
  %v1518 = vmul.f32 %v1492, %v1516
  %1520 = vrot.lane.b32.xlu0 %v1518, 64
  %v1521 = vpop.permute.xlu0 %1520
  %v1523 = vadd.f32 %v46, %v1521
  %v1524 = vtanh.pop %v1523
  %v1525 = vsub.f32 1.0, %v1512
  %1527 = vrot.lane.b32.xlu0 %v1524, 96
  %v1528 = vpop.permute.xlu0 %1527
  %v1530 = vmul.f32 %v1525, %v1528
  %v1531 = vmul.f32 %v1512, %v1380
  %v1532 = vadd.f32 %v1530, %v1531
  %v1533 = vsel %vm425, %v1445, %v1379
  %v1534 = vsel %vm419, %v1532, %v1380
  %1536 = vrot.lane.b32.xlu0 %v1533, 96
  %v1537 = vpop.permute.xlu0 %1536
  %v1538 = vsel %vm87, %v1537, 0
  %1540 = vmatpush.msra.mxu0 0.0
  %1541 = vmatpush.msra.mxu0 0.0
  %1542 = vmatpush.msra.mxu0 0.0
  %1543 = vmatpush.msra.mxu0 0.0
  %1544 = vmatpush.msra.mxu0 0.0
  %1545 = vmatpush.msra.mxu0 0.0
  %1546 = vmatpush.msra.mxu0 0.0
  %1547 = vmatpush.msra.mxu0 0.0
  %1548 = vmatpush.msra.mxu0 0.0
  %1549 = vmatpush.msra.mxu0 0.0
  %1550 = vmatpush.msra.mxu0 0.0
  %1551 = vmatpush.msra.mxu0 0.0
  %1552 = vmatpush.msra.mxu0 %v66
  %1553 = vmatpush.msra.mxu0 %v65
  %1554 = vmatpush.msra.mxu0 %v64
  %1555 = vmatpush.msra.mxu0 %v63
  %1556 = vmatmul.f32.gmra.mxu0 %v1538
  %v1557 = vpop.f32.mrf.mxu0
  %v1558 = vadd.f32 0.0, %v1557
  %1559 = vdwg.mxu0
  %v1560 = vadd.f32 %v61, %v1558
  %v1561 = vxor.u32 %v1560, 2147483648
  %v1562 = vmul.f32 %v1561, 1.442695
  %v1563 = vpow.pop %v1562
  %v1564 = vadd.f32 %v1563, 1.0
  %v1565 = vrcp.pop %v1564
  %v1566 = vmul.f32 %v1564, %v1565
  %v1567 = vsub.f32 1.0, %v1566
  %v1568 = vmul.f32 %v1565, %v1567
  %v1569 = vadd.f32 %v1565, %v1568
  %vm1570 = vweird.f32 %v1564
  %vm1571 = vweird.f32 %v1565
  %vm1572 = vmor %vm1570, %vm1571
  %v1573 = vsel %vm1572, %v1565, %v1569
  %v1574 = vand.u32 2147483647, %v1564
  %vm1575 = vcmp.eq.f32.partialorder %v1574, 8.507059e+37
  %v1576 = vand.u32 %v1564, 2147483648
  %v1577 = vor.u32 1.1754944e-38, %v1576
  %v1578 = vsel %vm1575, %v1577, %v1573
  %v1579 = vmul.f32 1.0, %v1578
  %v1580 = vadd.f32 %v1558, %v134
  %1582 = vrot.lane.b32.xlu0 %v1580, 64
  %v1583 = vpop.permute.xlu0 %1582
  %v1585 = vmul.f32 %v1579, %v1583
  %1587 = vrot.lane.b32.xlu0 %v1585, 64
  %v1588 = vpop.permute.xlu0 %1587
  %v1590 = vadd.f32 %v61, %v1588
  %v1591 = vtanh.pop %v1590
  %v1592 = vsub.f32 1.0, %v1579
  %1594 = vrot.lane.b32.xlu0 %v1591, 96
  %v1595 = vpop.permute.xlu0 %1594
  %v1597 = vmul.f32 %v1592, %v1595
  %v1598 = vmul.f32 %v1579, %v1533
  %v1599 = vadd.f32 %v1597, %v1598
  %v1601 = vsel %vm87, %v1534, 0
  %1603 = vmatpush.msra.mxu0 0.0
  %1604 = vmatpush.msra.mxu0 0.0
  %1605 = vmatpush.msra.mxu0 0.0
  %1606 = vmatpush.msra.mxu0 0.0
  %1607 = vmatpush.msra.mxu0 0.0
  %1608 = vmatpush.msra.mxu0 0.0
  %1609 = vmatpush.msra.mxu0 0.0
  %1610 = vmatpush.msra.mxu0 0.0
  %1611 = vmatpush.msra.mxu0 0.0
  %1612 = vmatpush.msra.mxu0 0.0
  %1613 = vmatpush.msra.mxu0 0.0
  %1614 = vmatpush.msra.mxu0 0.0
  %1615 = vmatpush.msra.mxu0 %v70
  %1616 = vmatpush.msra.mxu0 %v69
  %1617 = vmatpush.msra.mxu0 %v68
  %1618 = vmatpush.msra.mxu0 %v67
  %1619 = vmatmul.f32.gmra.mxu0 %v1601
  %v1620 = vpop.f32.mrf.mxu0
  %v1621 = vadd.f32 0.0, %v1620
  %1622 = vdwg.mxu0
  %1624 = vrot.lane.b32.xlu0 %v1621, 96
  %v1625 = vpop.permute.xlu0 %1624
  %v1627 = vadd.f32 %v43, %v1625
  %v1628 = vxor.u32 %v1627, 2147483648
  %v1629 = vmul.f32 %v1628, 1.442695
  %v1630 = vpow.pop %v1629
  %v1631 = vadd.f32 %v1630, 1.0
  %v1632 = vrcp.pop %v1631
  %v1633 = vmul.f32 %v1631, %v1632
  %v1634 = vsub.f32 1.0, %v1633
  %v1635 = vmul.f32 %v1632, %v1634
  %v1636 = vadd.f32 %v1632, %v1635
  %vm1637 = vweird.f32 %v1631
  %vm1638 = vweird.f32 %v1632
  %vm1639 = vmor %vm1637, %vm1638
  %v1640 = vsel %vm1639, %v1632, %v1636
  %v1641 = vand.u32 2147483647, %v1631
  %vm1642 = vcmp.eq.f32.partialorder %v1641, 8.507059e+37
  %v1643 = vand.u32 %v1631, 2147483648
  %v1644 = vor.u32 1.1754944e-38, %v1643
  %v1645 = vsel %vm1642, %v1644, %v1640
  %v1646 = vmul.f32 1.0, %v1645
  %v1647 = vadd.f32 %v44, %v1625
  %v1648 = vxor.u32 %v1647, 2147483648
  %v1649 = vmul.f32 %v1648, 1.442695
  %v1650 = vpow.pop %v1649
  %v1651 = vadd.f32 %v1650, 1.0
  %v1652 = vrcp.pop %v1651
  %v1653 = vmul.f32 %v1651, %v1652
  %v1654 = vsub.f32 1.0, %v1653
  %v1655 = vmul.f32 %v1652, %v1654
  %v1656 = vadd.f32 %v1652, %v1655
  %vm1657 = vweird.f32 %v1651
  %vm1658 = vweird.f32 %v1652
  %vm1659 = vmor %vm1657, %vm1658
  %v1660 = vsel %vm1659, %v1652, %v1656
  %v1661 = vand.u32 2147483647, %v1651
  %vm1662 = vcmp.eq.f32.partialorder %v1661, 8.507059e+37
  %v1663 = vand.u32 %v1651, 2147483648
  %v1664 = vor.u32 1.1754944e-38, %v1663
  %v1665 = vsel %vm1662, %v1664, %v1660
  %v1666 = vmul.f32 1.0, %v1665
  %v1667 = vadd.f32 %v1621, %v229
  %1669 = vrot.lane.b32.xlu0 %v1667, 32
  %v1670 = vpop.permute.xlu0 %1669
  %v1672 = vmul.f32 %v1646, %v1670
  %1674 = vrot.lane.b32.xlu0 %v1672, 64
  %v1675 = vpop.permute.xlu0 %1674
  %v1677 = vadd.f32 %v44, %v1675
  %v1678 = vtanh.pop %v1677
  %v1679 = vsub.f32 1.0, %v1666
  %1681 = vrot.lane.b32.xlu0 %v1678, 96
  %v1682 = vpop.permute.xlu0 %1681
  %v1684 = vmul.f32 %v1679, %v1682
  %v1685 = vmul.f32 %v1666, %v1534
  %v1686 = vadd.f32 %v1684, %v1685
  %v1687 = vsel %vm261, %v1599, %v1533
  %v1688 = vsel %vm255, %v1686, %v1534
  %1690 = vrot.lane.b32.xlu0 %v1687, 96
  %v1691 = vpop.permute.xlu0 %1690
  %1693 = vst.msk [vmem:[%s12] sm:$0xff] %vm87, %v1691
  %1695 = vrot.lane.b32.xlu0 %v1688, 32
  %v1696 = vpop.permute.xlu0 %1695
  %vm1698 = vcmask 523520
  %1699 = vst.msk [vmem:[%s12] sm:$0xff] %vm1698, %v1696
  %v1700 = vld [vmem:[%s7] sm:$0xff]
  %v1701 = vld [vmem:[%s7 + $0x8] sm:$0xff]
  %v1702 = vld [vmem:[%s7 + $0x10] sm:$0xff]
  %v1703 = vld [vmem:[%s7 + $0x18] sm:$0xff]
  %v1704 = vld [vmem:[%s8] sm:$0xff]
  %v1705 = vld [vmem:[%s8 + $0x8] sm:$0xff]
  %v1706 = vld [vmem:[%s8 + $0x10] sm:$0xff]
  %v1707 = vld [vmem:[%s8 + $0x18] sm:$0xff]
  %v1708 = vsel %vm87, %v1688, 0
  %1710 = vmatpush.msra.mxu0 0.0
  %1711 = vmatpush.msra.mxu0 0.0
  %1712 = vmatpush.msra.mxu0 0.0
  %1713 = vmatpush.msra.mxu0 0.0
  %1714 = vmatpush.msra.mxu0 0.0
  %1715 = vmatpush.msra.mxu0 0.0
  %1716 = vmatpush.msra.mxu0 0.0
  %1717 = vmatpush.msra.mxu0 0.0
  %1718 = vmatpush.msra.mxu0 0.0
  %1719 = vmatpush.msra.mxu0 0.0
  %1720 = vmatpush.msra.mxu0 0.0
  %1721 = vmatpush.msra.mxu0 0.0
  %1722 = vmatpush.msra.mxu0 %v1707
  %1723 = vmatpush.msra.mxu0 %v1706
  %1724 = vmatpush.msra.mxu0 %v1705
  %1725 = vmatpush.msra.mxu0 %v1704
  %1726 = vmatmul.f32.gmra.mxu0 %v1708
  %v1727 = vpop.f32.mrf.mxu0
  %v1728 = vadd.f32 0.0, %v1727
  %1729 = vdwg.mxu0
  %v1730 = vsel %vm87, %v1691, 0
  %1732 = vmatpush.msra.mxu0 0.0
  %1733 = vmatpush.msra.mxu0 0.0
  %1734 = vmatpush.msra.mxu0 0.0
  %1735 = vmatpush.msra.mxu0 0.0
  %1736 = vmatpush.msra.mxu0 0.0
  %1737 = vmatpush.msra.mxu0 0.0
  %1738 = vmatpush.msra.mxu0 0.0
  %1739 = vmatpush.msra.mxu0 0.0
  %1740 = vmatpush.msra.mxu0 0.0
  %1741 = vmatpush.msra.mxu0 0.0
  %1742 = vmatpush.msra.mxu0 0.0
  %1743 = vmatpush.msra.mxu0 0.0
  %1744 = vmatpush.msra.mxu0 %v1703
  %1745 = vmatpush.msra.mxu0 %v1702
  %1746 = vmatpush.msra.mxu0 %v1701
  %1747 = vmatpush.msra.mxu0 %v1700
  %1748 = vmatmul.f32.gmra.mxu0 %v1730
  %v1749 = vpop.f32.mrf.mxu0
  %v1750 = vadd.f32 %v1728, %v1749
  %1751 = vdwg.mxu0
  %v1752 = vld [vmem:[%s9] sm:$0x1]
  %v1754 = vperm.slane %v1752, 0
  %v1756 = vadd.f32 %v1750, %v1754
  %v1757 = vmax.f32 %v1756, 0.0
  %v1758 = vld [vmem:[%s10] sm:$0xff]
  %v1759 = vld [vmem:[%s10 + $0x8] sm:$0xff]
  %v1760 = vld [vmem:[%s10 + $0x10] sm:$0xff]
  %v1761 = vld [vmem:[%s10 + $0x18] sm:$0xff]
  %v1762 = vld [vmem:[%s10 + $0x20] sm:$0xff]
  %v1763 = vld [vmem:[%s10 + $0x28] sm:$0xff]
  %v1764 = vld [vmem:[%s10 + $0x30] sm:$0xff]
  %v1765 = vld [vmem:[%s10 + $0x38] sm:$0xff]
  %v1766 = vld [vmem:[%s10 + $0x40] sm:$0xff]
  %v1767 = vld [vmem:[%s10 + $0x48] sm:$0xff]
  %v1768 = vld [vmem:[%s10 + $0x50] sm:$0xff]
  %v1769 = vld [vmem:[%s10 + $0x58] sm:$0xff]
  %v1770 = vld [vmem:[%s10 + $0x60] sm:$0xf]
  %v1771 = vld [vmem:[%s11] sm:$0x1]
  %v1773 = vperm.slane %v1771, 0
  %vm1775 = vcmask 818176
  %v1777 = vsel %vm1775, %v1757, 0
  %vm1779 = vcmask 1043456
  %v1781 = vsel %vm1779, %v1770, 0
  %1783 = vmatpush.msra.mxu0 0.0
  %1784 = vmatpush.msra.mxu0 0.0
  %1785 = vmatpush.msra.mxu0 0.0
  %1786 = vmatpush.msra.mxu0 %v1781
  %1787 = vmatpush.msra.mxu0 %v1769
  %1788 = vmatpush.msra.mxu0 %v1768
  %1789 = vmatpush.msra.mxu0 %v1767
  %1790 = vmatpush.msra.mxu0 %v1766
  %1791 = vmatpush.msra.mxu0 %v1765
  %1792 = vmatpush.msra.mxu0 %v1764
  %1793 = vmatpush.msra.mxu0 %v1763
  %1794 = vmatpush.msra.mxu0 %v1762
  %1795 = vmatpush.msra.mxu0 %v1761
  %1796 = vmatpush.msra.mxu0 %v1760
  %1797 = vmatpush.msra.mxu0 %v1759
  %1798 = vmatpush.msra.mxu0 %v1758
  %1799 = vmatmul.f32.gmra.mxu0 %v1777
  %v1800 = vpop.f32.mrf.mxu0
  %v1801 = vadd.f32 %v1773, %v1800
  %1802 = vdwg.mxu0
  %vm1803 = vcmask 23552
  %1804 = vst.msk [vmem:[%s13] sm:$0xff] %vm1803, %v1801
  // Predicated region
  $region50: #{two_sentence_forward.1} parent=0 // pred_check
    _
  $region51: #{two_sentence_forward.1} parent=0 // pred_check_branch
    %1806 = sbr.rel (0) target = $region53
  $region52: #{two_sentence_forward.1} parent=0 // pred_region
    _
  $region53: #{two_sentence_forward.1} parent=0 // pred_fallthru
    _
  // Predicated region
  $region54: #{two_sentence_forward.1} parent=0 // pred_check
    _
  $region55: #{two_sentence_forward.1} parent=0 // pred_check_branch
    %1808 = sbr.rel (0) target = $region57
  $region56: #{two_sentence_forward.1} parent=0 // pred_region
    _
  $region57: #{two_sentence_forward.1} parent=0 // pred_fallthru
    _
  // Predicated region
  $region58: #{two_sentence_forward.1} parent=0 // pred_check
    _
  $region59: #{two_sentence_forward.1} parent=0 // pred_check_branch
    %1810 = sbr.rel (0) target = $region61
  $region60: #{two_sentence_forward.1} parent=0 // pred_region
    _
  $region61: #{two_sentence_forward.1} parent=0 // pred_fallthru
    _
  // Predicated region
  $region62: #{two_sentence_forward.1} parent=0 // pred_check
    _
  $region63: #{two_sentence_forward.1} parent=0 // pred_check_branch
    %1812 = sbr.rel (0) target = $region65
  $region64: #{two_sentence_forward.1} parent=0 // pred_region
    _
  $region65: #{two_sentence_forward.1} parent=0 // pred_fallthru
    _

</llo_original>
